<compile_context>
chip_gen: v6e
topology: v6e:2x2x1
jax: 0.10.0
libtpu: 0.0.40
codegen_flags: <defaults>
</compile_context>

<pallas_src>
import functools

import jax
import jax.numpy as jnp
from jax.experimental import pallas as pl
from jax.experimental.pallas import tpu as pltpu


def _round_up(n, m):
    return ((n + m - 1) // m) * m


def lstm_tagger_kernel(x_ref, wih_ref, whh_ref, b_ref, wtag_ref, btag_ref,
                       out_ref, xg_ref, *, seq_len, batch_pad):
    # x_ref:    (T*Bp, Ep)    bf16, time-major: rows [t*Bp, (t+1)*Bp) = timestep t
    # wih_ref:  (Ep, 4*Hp)    bf16  (per-gate padded, transposed)
    # whh_ref:  (Hp, 4*Hp)    bf16  (per-gate padded, transposed)
    # b_ref:    (1, 4*Hp)     f32   (b_ih + b_hh, per-gate padded)
    # wtag_ref: (Hp, Cp)      bf16  (padded, transposed)
    # btag_ref: (1, Cp)       f32
    # out_ref:  (Bp, Cp)      f32
    # xg_ref:   (T*Bp, 4*Hp)  f32 scratch (hoisted input projection)
    T = seq_len
    Bp = batch_pad
    Hp = whh_ref.shape[0]

    # (1) Hoisted input projection: a single large MXU call for all timesteps.
    xg_ref[...] = (
        jnp.dot(x_ref[...], wih_ref[...], preferred_element_type=jnp.float32)
        + b_ref[...]
    )

    h = jnp.zeros((Bp, Hp), jnp.float32)
    c = jnp.zeros((Bp, Hp), jnp.float32)

    # (2) Fully unrolled recurrence (T static & small): only the recurrent
    #     matmul + gate nonlinearities remain on the serial critical path.
    #     W_hh is re-read from VMEM every step (vld slots, hidden under MXU
    #     latency) instead of being held live across the unroll -> no spills.
    for t in range(T):
        xg_t = xg_ref[t * Bp:(t + 1) * Bp, :]                 # static slice
        gates = xg_t + jnp.dot(h.astype(jnp.bfloat16), whh_ref[...],
                               preferred_element_type=jnp.float32)
        # Hp is a multiple of 128 -> each gate slice is whole vregs.
        i_g = jax.nn.sigmoid(gates[:, 0 * Hp:1 * Hp])
        f_g = jax.nn.sigmoid(gates[:, 1 * Hp:2 * Hp])
        g_g = jnp.tanh(gates[:, 2 * Hp:3 * Hp])
        o_g = jax.nn.sigmoid(gates[:, 3 * Hp:4 * Hp])
        c = f_g * c + i_g * g_g
        h = o_g * jnp.tanh(c)

    # Last-timestep Linear head (lane-dense Cp-wide store).
    out_ref[...] = (
        jnp.dot(h.astype(jnp.bfloat16), wtag_ref[...],
                preferred_element_type=jnp.float32)
        + btag_ref[...]
    )


def prepare_params(params):
    """One-time weight prep: pad/transpose/cast PyTorch-layout params.

    Runs once at param-init time so the per-forward path is only x padding
    + pallas_call.
    """
    w_ih, w_hh, b_ih, b_hh, w_tag, b_tag = params
    H = w_hh.shape[1]          # PyTorch W_hh is (4H, H)
    E = w_ih.shape[1]          # PyTorch W_ih is (4H, E)
    C = w_tag.shape[0]         # PyTorch W_tag is (C, H)

    Ep = _round_up(E, 128)     # lane multiple
    Hp = _round_up(H, 128)     # lane multiple -> lane-aligned gate slices
    Cp = _round_up(C, 128)     # lane-dense output

    f32, bf16 = jnp.float32, jnp.bfloat16

    # PyTorch packs gates as (i, f, g, o) blocks of size H along dim 0; pad
    # each block to Hp.  Padded rows/cols stay zero => padded hidden units keep
    # h = c = 0 for the whole recurrence and cannot leak into real gates.
    def pad_gates_T(w, in_dim, in_pad):  # (4H, in_dim) -> (in_pad, 4*Hp) bf16
        wg = w.astype(f32).reshape(4, H, in_dim)          # (4, H, in)
        wg = jnp.transpose(wg, (0, 2, 1))                 # (4, in, H)
        wg = jnp.pad(wg, ((0, 0), (0, in_pad - in_dim), (0, Hp - H)))
        wg = jnp.transpose(wg, (1, 0, 2)).reshape(in_pad, 4 * Hp)
        return wg.astype(bf16)

    wih_p = pad_gates_T(w_ih, E, Ep)                      # (Ep, 4Hp)
    whh_p = pad_gates_T(w_hh, H, Hp)                      # (Hp, 4Hp)

    b_sum = (b_ih + b_hh).astype(f32).reshape(4, H)
    b_p = jnp.pad(b_sum, ((0, 0), (0, Hp - H))).reshape(1, 4 * Hp)

    wtag_p = jnp.pad(jnp.transpose(w_tag).astype(f32),
                     ((0, Hp - H), (0, Cp - C))).astype(bf16)   # (Hp, Cp)
    btag_p = jnp.pad(b_tag.astype(f32), (0, Cp - C)).reshape(1, Cp)

    dims = dict(E=E, H=H, C=C, Ep=Ep, Hp=Hp, Cp=Cp)
    return (wih_p, whh_p, b_p, wtag_p, btag_p), dims


def lstm_tagger_forward(x_btE, prepped):
    """x_btE: (B, T, E) batch_first like the PyTorch module. Returns (B, tagset)."""
    (wih_p, whh_p, b_p, wtag_p, btag_p), dims = prepped
    B, T, E = x_btE.shape
    Ep, Hp, Cp, C = dims["Ep"], dims["Hp"], dims["Cp"], dims["C"]
    Bp = _round_up(B, 16)      # sublane multiple (bf16 packing)

    f32, bf16 = jnp.float32, jnp.bfloat16

    # time-major, batch/feature-padded input, flattened to (T*Bp, Ep).
    # Built directly in bf16 with a single transpose + pad (no f32 detour).
    x = jnp.transpose(x_btE, (1, 0, 2)).astype(bf16)               # (T, B, E)
    x = jnp.pad(x, ((0, 0), (0, Bp - B), (0, Ep - E))).reshape(T * Bp, Ep)

    # Right-size the VMEM limit from the actual resident footprint.
    footprint = (
        x.size * 2 + wih_p.size * 2 + whh_p.size * 2 + b_p.size * 4
        + wtag_p.size * 2 + btag_p.size * 4
        + Bp * Cp * 4                      # out
        + T * Bp * 4 * Hp * 4              # xg scratch (f32)
    )
    vmem_limit = max(2 * footprint, 2 * 1024 * 1024)

    vmem = pl.BlockSpec(memory_space=pltpu.VMEM)
    kernel = functools.partial(lstm_tagger_kernel, seq_len=T, batch_pad=Bp)
    out_p = pl.pallas_call(
        kernel,
        out_shape=jax.ShapeDtypeStruct((Bp, Cp), f32),
        in_specs=[vmem] * 6,
        out_specs=vmem,
        scratch_shapes=[pltpu.VMEM((T * Bp, 4 * Hp), f32)],
        compiler_params=pltpu.CompilerParams(vmem_limit_bytes=int(vmem_limit)),
    )(x, wih_p, whh_p, b_p, wtag_p, btag_p)

    # Slice away batch / tag padding.
    return out_p[:B, :C]


def init_params(key, embedding_dim, hidden_dim, tagset_size):
    """Deterministic synthetic params matching nn.LSTM + nn.Linear shapes."""
    ks = jax.random.split(key, 6)
    k = 1.0 / jnp.sqrt(hidden_dim)
    w_ih = jax.random.uniform(ks[0], (4 * hidden_dim, embedding_dim), jnp.float32, -k, k)
    w_hh = jax.random.uniform(ks[1], (4 * hidden_dim, hidden_dim), jnp.float32, -k, k)
    b_ih = jax.random.uniform(ks[2], (4 * hidden_dim,), jnp.float32, -k, k)
    b_hh = jax.random.uniform(ks[3], (4 * hidden_dim,), jnp.float32, -k, k)
    w_tag = jax.random.uniform(ks[4], (tagset_size, hidden_dim), jnp.float32, -k, k)
    b_tag = jax.random.uniform(ks[5], (tagset_size,), jnp.float32, -k, k)
    return (w_ih, w_hh, b_ih, b_hh, w_tag, b_tag)


def reference_forward(x_btE, params, *, bf16_operands=False):
    """Pure-JAX reference of the PyTorch forward.

    bf16_operands=True rounds every matmul operand through bf16 (f32 math),
    mimicking the kernel's MXU numerics for a tight structural check.
    """
    w_ih, w_hh, b_ih, b_hh, w_tag, b_tag = params
    B, T, E = x_btE.shape
    H = w_hh.shape[1]
    if bf16_operands:
        cast = lambda a: a.astype(jnp.bfloat16).astype(jnp.float32)
    else:
        cast = lambda a: a.astype(jnp.float32)
    x = cast(x_btE)
    wih_t = cast(jnp.transpose(w_ih))
    whh_t = cast(jnp.transpose(w_hh))
    wtag_t = cast(jnp.transpose(w_tag))
    b = (b_ih + b_hh).astype(jnp.float32)
    h = jnp.zeros((B, H), jnp.float32)
    c = jnp.zeros((B, H), jnp.float32)
    for t in range(T):
        g = x[:, t, :] @ wih_t + b + cast(h) @ whh_t
        i = jax.nn.sigmoid(g[:, :H])
        f = jax.nn.sigmoid(g[:, H:2 * H])
        gg = jnp.tanh(g[:, 2 * H:3 * H])
        o = jax.nn.sigmoid(g[:, 3 * H:4 * H])
        c = f * c + i * gg
        h = o * jnp.tanh(c)
    return cast(h) @ wtag_t + b_tag.astype(jnp.float32)


if __name__ == "__main__":
    B, T, E, H, C = 2, 8, 16, 32, 4  # batch, seq, embedding_dim, hidden_dim, tagset_size

    key = jax.random.PRNGKey(0)
    kx, kp = jax.random.split(key)
    x = jax.random.normal(kx, (B, T, E), dtype=jnp.float32)
    params = init_params(kp, E, H, C)

    # One-time weight prep (padding/transpose/bf16) hoisted out of the forward.
    prepped = prepare_params(params)

    out = jax.block_until_ready(lstm_tagger_forward(x, prepped))
    assert out.shape == (B, C)

    # Tight check vs a reference mimicking the kernel's bf16 matmul operands,
    # plus a loose check vs the exact-f32 PyTorch-equivalent forward.
    ref_bf16 = reference_forward(x, params, bf16_operands=True)
    ref_f32 = reference_forward(x, params, bf16_operands=False)
    assert jnp.allclose(out, ref_bf16, atol=2e-3, rtol=2e-3), "mismatch vs bf16-rounded reference"
    assert jnp.allclose(out, ref_f32, atol=5e-2, rtol=5e-2), "mismatch vs f32 reference"

    print("KERNEL_OK")
</pallas_src>

<mosaic_0001>
module attributes {stable_mosaic.version = 11 : i64} {
  func.func @lstm_tagger_kernel(%arg0: memref<128x128xbf16, #tpu.memory_space<vmem>>, %arg1: memref<128x512xbf16, #tpu.memory_space<vmem>>, %arg2: memref<128x512xbf16, #tpu.memory_space<vmem>>, %arg3: memref<1x512xf32, #tpu.memory_space<vmem>>, %arg4: memref<128x128xbf16, #tpu.memory_space<vmem>>, %arg5: memref<1x128xf32, #tpu.memory_space<vmem>>, %arg6: memref<16x128xf32, #tpu.memory_space<vmem>>, %arg7: memref<128x512xf32, #tpu.memory_space<vmem>>) attributes {dimension_semantics = [], scalar_prefetch = 0 : i64, scratch_operands = 1 : i64, tpu.core_type = #tpu.core_type<tc>} {
    %c0 = arith.constant 0 : index
    %c0_0 = arith.constant 0 : index
    %0 = vector.load %arg0[%c0, %c0_0] : memref<128x128xbf16, #tpu.memory_space<vmem>>, vector<128x128xbf16>
    %c0_1 = arith.constant 0 : index
    %c0_2 = arith.constant 0 : index
    %1 = vector.load %arg1[%c0_1, %c0_2] : memref<128x512xbf16, #tpu.memory_space<vmem>>, vector<128x512xbf16>
    %cst = arith.constant dense<0.000000e+00> : vector<128x512xf32>
    %2 = tpu.matmul %0, %1, %cst {dimension_numbers = #tpu.dot_dimension_numbers<[1], [0], [0], [1], [0, 0, 1, 1], [], []>} : vector<128x128xbf16>, vector<128x512xbf16>, vector<128x512xf32> -> vector<128x512xf32>
    %c0_3 = arith.constant 0 : index
    %c0_4 = arith.constant 0 : index
    %3 = vector.load %arg3[%c0_3, %c0_4] : memref<1x512xf32, #tpu.memory_space<vmem>>, vector<1x512xf32>
    %4 = vector.broadcast %3 : vector<1x512xf32> to vector<128x512xf32>
    %5 = arith.addf %2, %4 : vector<128x512xf32>
    %c0_5 = arith.constant 0 : index
    %c0_6 = arith.constant 0 : index
    %6 = vector.load %arg7[%c0_5, %c0_6] : memref<128x512xf32, #tpu.memory_space<vmem>>, vector<128x512xf32>
    tpu.vector_store %arg7[%c0_5, %c0_6], %5 {strides = array<i32>} : memref<128x512xf32, #tpu.memory_space<vmem>>, vector<128x512xf32>,
    %cst_7 = arith.constant 0.000000e+00 : f32
    %7 = vector.broadcast %cst_7 : f32 to vector<16x128xf32>
    %cst_8 = arith.constant 0.000000e+00 : f32
    %8 = vector.broadcast %cst_8 : f32 to vector<16x128xf32>
    %c0_9 = arith.constant 0 : index
    %c0_10 = arith.constant 0 : index
    %9 = vector.load %arg7[%c0_9, %c0_10] : memref<128x512xf32, #tpu.memory_space<vmem>>, vector<16x512xf32>
    %10 = arith.truncf %7 : vector<16x128xf32> to vector<16x128xbf16>
    %c0_11 = arith.constant 0 : index
    %c0_12 = arith.constant 0 : index
    %11 = vector.load %arg2[%c0_11, %c0_12] : memref<128x512xbf16, #tpu.memory_space<vmem>>, vector<128x512xbf16>
    %cst_13 = arith.constant dense<0.000000e+00> : vector<16x512xf32>
    %12 = tpu.matmul %10, %11, %cst_13 {dimension_numbers = #tpu.dot_dimension_numbers<[1], [0], [0], [1], [0, 0, 1, 1], [], []>} : vector<16x128xbf16>, vector<128x512xbf16>, vector<16x512xf32> -> vector<16x512xf32>
    %13 = arith.addf %9, %12 : vector<16x512xf32>
    %14 = vector.extract_strided_slice %13 {offsets = [0, 0], sizes = [16, 128], strides = [1, 1]} : vector<16x512xf32> to vector<16x128xf32>
    %15 = arith.negf %14 : vector<16x128xf32>
    %16 = math.exp %15 : vector<16x128xf32>
    %cst_14 = arith.constant 1.000000e+00 : f32
    %17 = vector.broadcast %cst_14 : f32 to vector<16x128xf32>
    %18 = arith.addf %17, %16 : vector<16x128xf32>
    %19 = arith.divf %17, %18 : vector<16x128xf32>
    %20 = vector.extract_strided_slice %13 {offsets = [0, 128], sizes = [16, 128], strides = [1, 1]} : vector<16x512xf32> to vector<16x128xf32>
    %21 = arith.negf %20 : vector<16x128xf32>
    %22 = math.exp %21 : vector<16x128xf32>
    %cst_15 = arith.constant 1.000000e+00 : f32
    %23 = vector.broadcast %cst_15 : f32 to vector<16x128xf32>
    %24 = arith.addf %23, %22 : vector<16x128xf32>
    %25 = arith.divf %23, %24 : vector<16x128xf32>
    %26 = vector.extract_strided_slice %13 {offsets = [0, 256], sizes = [16, 128], strides = [1, 1]} : vector<16x512xf32> to vector<16x128xf32>
    %27 = math.tanh %26 : vector<16x128xf32>
    %28 = vector.extract_strided_slice %13 {offsets = [0, 384], sizes = [16, 128], strides = [1, 1]} : vector<16x512xf32> to vector<16x128xf32>
    %29 = arith.negf %28 : vector<16x128xf32>
    %30 = math.exp %29 : vector<16x128xf32>
    %cst_16 = arith.constant 1.000000e+00 : f32
    %31 = vector.broadcast %cst_16 : f32 to vector<16x128xf32>
    %32 = arith.addf %31, %30 : vector<16x128xf32>
    %33 = arith.divf %31, %32 : vector<16x128xf32>
    %34 = arith.mulf %25, %8 : vector<16x128xf32>
    %35 = arith.mulf %19, %27 : vector<16x128xf32>
    %36 = arith.addf %34, %35 : vector<16x128xf32>
    %37 = math.tanh %36 : vector<16x128xf32>
    %38 = arith.mulf %33, %37 : vector<16x128xf32>
    %c16 = arith.constant 16 : index
    %c0_17 = arith.constant 0 : index
    %39 = vector.load %arg7[%c16, %c0_17] : memref<128x512xf32, #tpu.memory_space<vmem>>, vector<16x512xf32>
    %40 = arith.truncf %38 : vector<16x128xf32> to vector<16x128xbf16>
    %c0_18 = arith.constant 0 : index
    %c0_19 = arith.constant 0 : index
    %41 = vector.load %arg2[%c0_18, %c0_19] : memref<128x512xbf16, #tpu.memory_space<vmem>>, vector<128x512xbf16>
    %cst_20 = arith.constant dense<0.000000e+00> : vector<16x512xf32>
    %42 = tpu.matmul %40, %41, %cst_20 {dimension_numbers = #tpu.dot_dimension_numbers<[1], [0], [0], [1], [0, 0, 1, 1], [], []>} : vector<16x128xbf16>, vector<128x512xbf16>, vector<16x512xf32> -> vector<16x512xf32>
    %43 = arith.addf %39, %42 : vector<16x512xf32>
    %44 = vector.extract_strided_slice %43 {offsets = [0, 0], sizes = [16, 128], strides = [1, 1]} : vector<16x512xf32> to vector<16x128xf32>
    %45 = arith.negf %44 : vector<16x128xf32>
    %46 = math.exp %45 : vector<16x128xf32>
    %cst_21 = arith.constant 1.000000e+00 : f32
    %47 = vector.broadcast %cst_21 : f32 to vector<16x128xf32>
    %48 = arith.addf %47, %46 : vector<16x128xf32>
    %49 = arith.divf %47, %48 : vector<16x128xf32>
    %50 = vector.extract_strided_slice %43 {offsets = [0, 128], sizes = [16, 128], strides = [1, 1]} : vector<16x512xf32> to vector<16x128xf32>
    %51 = arith.negf %50 : vector<16x128xf32>
    %52 = math.exp %51 : vector<16x128xf32>
    %cst_22 = arith.constant 1.000000e+00 : f32
    %53 = vector.broadcast %cst_22 : f32 to vector<16x128xf32>
    %54 = arith.addf %53, %52 : vector<16x128xf32>
    %55 = arith.divf %53, %54 : vector<16x128xf32>
    %56 = vector.extract_strided_slice %43 {offsets = [0, 256], sizes = [16, 128], strides = [1, 1]} : vector<16x512xf32> to vector<16x128xf32>
    %57 = math.tanh %56 : vector<16x128xf32>
    %58 = vector.extract_strided_slice %43 {offsets = [0, 384], sizes = [16, 128], strides = [1, 1]} : vector<16x512xf32> to vector<16x128xf32>
    %59 = arith.negf %58 : vector<16x128xf32>
    %60 = math.exp %59 : vector<16x128xf32>
    %cst_23 = arith.constant 1.000000e+00 : f32
    %61 = vector.broadcast %cst_23 : f32 to vector<16x128xf32>
    %62 = arith.addf %61, %60 : vector<16x128xf32>
    %63 = arith.divf %61, %62 : vector<16x128xf32>
    %64 = arith.mulf %55, %36 : vector<16x128xf32>
    %65 = arith.mulf %49, %57 : vector<16x128xf32>
    %66 = arith.addf %64, %65 : vector<16x128xf32>
    %67 = math.tanh %66 : vector<16x128xf32>
    %68 = arith.mulf %63, %67 : vector<16x128xf32>
    %c32 = arith.constant 32 : index
    %c0_24 = arith.constant 0 : index
    %69 = vector.load %arg7[%c32, %c0_24] : memref<128x512xf32, #tpu.memory_space<vmem>>, vector<16x512xf32>
    %70 = arith.truncf %68 : vector<16x128xf32> to vector<16x128xbf16>
    %c0_25 = arith.constant 0 : index
    %c0_26 = arith.constant 0 : index
    %71 = vector.load %arg2[%c0_25, %c0_26] : memref<128x512xbf16, #tpu.memory_space<vmem>>, vector<128x512xbf16>
    %cst_27 = arith.constant dense<0.000000e+00> : vector<16x512xf32>
    %72 = tpu.matmul %70, %71, %cst_27 {dimension_numbers = #tpu.dot_dimension_numbers<[1], [0], [0], [1], [0, 0, 1, 1], [], []>} : vector<16x128xbf16>, vector<128x512xbf16>, vector<16x512xf32> -> vector<16x512xf32>
    %73 = arith.addf %69, %72 : vector<16x512xf32>
    %74 = vector.extract_strided_slice %73 {offsets = [0, 0], sizes = [16, 128], strides = [1, 1]} : vector<16x512xf32> to vector<16x128xf32>
    %75 = arith.negf %74 : vector<16x128xf32>
    %76 = math.exp %75 : vector<16x128xf32>
    %cst_28 = arith.constant 1.000000e+00 : f32
    %77 = vector.broadcast %cst_28 : f32 to vector<16x128xf32>
    %78 = arith.addf %77, %76 : vector<16x128xf32>
    %79 = arith.divf %77, %78 : vector<16x128xf32>
    %80 = vector.extract_strided_slice %73 {offsets = [0, 128], sizes = [16, 128], strides = [1, 1]} : vector<16x512xf32> to vector<16x128xf32>
    %81 = arith.negf %80 : vector<16x128xf32>
    %82 = math.exp %81 : vector<16x128xf32>
    %cst_29 = arith.constant 1.000000e+00 : f32
    %83 = vector.broadcast %cst_29 : f32 to vector<16x128xf32>
    %84 = arith.addf %83, %82 : vector<16x128xf32>
    %85 = arith.divf %83, %84 : vector<16x128xf32>
    %86 = vector.extract_strided_slice %73 {offsets = [0, 256], sizes = [16, 128], strides = [1, 1]} : vector<16x512xf32> to vector<16x128xf32>
    %87 = math.tanh %86 : vector<16x128xf32>
    %88 = vector.extract_strided_slice %73 {offsets = [0, 384], sizes = [16, 128], strides = [1, 1]} : vector<16x512xf32> to vector<16x128xf32>
    %89 = arith.negf %88 : vector<16x128xf32>
    %90 = math.exp %89 : vector<16x128xf32>
    %cst_30 = arith.constant 1.000000e+00 : f32
    %91 = vector.broadcast %cst_30 : f32 to vector<16x128xf32>
    %92 = arith.addf %91, %90 : vector<16x128xf32>
    %93 = arith.divf %91, %92 : vector<16x128xf32>
    %94 = arith.mulf %85, %66 : vector<16x128xf32>
    %95 = arith.mulf %79, %87 : vector<16x128xf32>
    %96 = arith.addf %94, %95 : vector<16x128xf32>
    %97 = math.tanh %96 : vector<16x128xf32>
    %98 = arith.mulf %93, %97 : vector<16x128xf32>
    %c48 = arith.constant 48 : index
    %c0_31 = arith.constant 0 : index
    %99 = vector.load %arg7[%c48, %c0_31] : memref<128x512xf32, #tpu.memory_space<vmem>>, vector<16x512xf32>
    %100 = arith.truncf %98 : vector<16x128xf32> to vector<16x128xbf16>
    %c0_32 = arith.constant 0 : index
    %c0_33 = arith.constant 0 : index
    %101 = vector.load %arg2[%c0_32, %c0_33] : memref<128x512xbf16, #tpu.memory_space<vmem>>, vector<128x512xbf16>
    %cst_34 = arith.constant dense<0.000000e+00> : vector<16x512xf32>
    %102 = tpu.matmul %100, %101, %cst_34 {dimension_numbers = #tpu.dot_dimension_numbers<[1], [0], [0], [1], [0, 0, 1, 1], [], []>} : vector<16x128xbf16>, vector<128x512xbf16>, vector<16x512xf32> -> vector<16x512xf32>
    %103 = arith.addf %99, %102 : vector<16x512xf32>
    %104 = vector.extract_strided_slice %103 {offsets = [0, 0], sizes = [16, 128], strides = [1, 1]} : vector<16x512xf32> to vector<16x128xf32>
    %105 = arith.negf %104 : vector<16x128xf32>
    %106 = math.exp %105 : vector<16x128xf32>
    %cst_35 = arith.constant 1.000000e+00 : f32
    %107 = vector.broadcast %cst_35 : f32 to vector<16x128xf32>
    %108 = arith.addf %107, %106 : vector<16x128xf32>
    %109 = arith.divf %107, %108 : vector<16x128xf32>
    %110 = vector.extract_strided_slice %103 {offsets = [0, 128], sizes = [16, 128], strides = [1, 1]} : vector<16x512xf32> to vector<16x128xf32>
    %111 = arith.negf %110 : vector<16x128xf32>
    %112 = math.exp %111 : vector<16x128xf32>
    %cst_36 = arith.constant 1.000000e+00 : f32
    %113 = vector.broadcast %cst_36 : f32 to vector<16x128xf32>
    %114 = arith.addf %113, %112 : vector<16x128xf32>
    %115 = arith.divf %113, %114 : vector<16x128xf32>
    %116 = vector.extract_strided_slice %103 {offsets = [0, 256], sizes = [16, 128], strides = [1, 1]} : vector<16x512xf32> to vector<16x128xf32>
    %117 = math.tanh %116 : vector<16x128xf32>
    %118 = vector.extract_strided_slice %103 {offsets = [0, 384], sizes = [16, 128], strides = [1, 1]} : vector<16x512xf32> to vector<16x128xf32>
    %119 = arith.negf %118 : vector<16x128xf32>
    %120 = math.exp %119 : vector<16x128xf32>
    %cst_37 = arith.constant 1.000000e+00 : f32
    %121 = vector.broadcast %cst_37 : f32 to vector<16x128xf32>
    %122 = arith.addf %121, %120 : vector<16x128xf32>
    %123 = arith.divf %121, %122 : vector<16x128xf32>
    %124 = arith.mulf %115, %96 : vector<16x128xf32>
    %125 = arith.mulf %109, %117 : vector<16x128xf32>
    %126 = arith.addf %124, %125 : vector<16x128xf32>
    %127 = math.tanh %126 : vector<16x128xf32>
    %128 = arith.mulf %123, %127 : vector<16x128xf32>
    %c64 = arith.constant 64 : index
    %c0_38 = arith.constant 0 : index
    %129 = vector.load %arg7[%c64, %c0_38] : memref<128x512xf32, #tpu.memory_space<vmem>>, vector<16x512xf32>
    %130 = arith.truncf %128 : vector<16x128xf32> to vector<16x128xbf16>
    %c0_39 = arith.constant 0 : index
    %c0_40 = arith.constant 0 : index
    %131 = vector.load %arg2[%c0_39, %c0_40] : memref<128x512xbf16, #tpu.memory_space<vmem>>, vector<128x512xbf16>
    %cst_41 = arith.constant dense<0.000000e+00> : vector<16x512xf32>
    %132 = tpu.matmul %130, %131, %cst_41 {dimension_numbers = #tpu.dot_dimension_numbers<[1], [0], [0], [1], [0, 0, 1, 1], [], []>} : vector<16x128xbf16>, vector<128x512xbf16>, vector<16x512xf32> -> vector<16x512xf32>
    %133 = arith.addf %129, %132 : vector<16x512xf32>
    %134 = vector.extract_strided_slice %133 {offsets = [0, 0], sizes = [16, 128], strides = [1, 1]} : vector<16x512xf32> to vector<16x128xf32>
    %135 = arith.negf %134 : vector<16x128xf32>
    %136 = math.exp %135 : vector<16x128xf32>
    %cst_42 = arith.constant 1.000000e+00 : f32
    %137 = vector.broadcast %cst_42 : f32 to vector<16x128xf32>
    %138 = arith.addf %137, %136 : vector<16x128xf32>
    %139 = arith.divf %137, %138 : vector<16x128xf32>
    %140 = vector.extract_strided_slice %133 {offsets = [0, 128], sizes = [16, 128], strides = [1, 1]} : vector<16x512xf32> to vector<16x128xf32>
    %141 = arith.negf %140 : vector<16x128xf32>
    %142 = math.exp %141 : vector<16x128xf32>
    %cst_43 = arith.constant 1.000000e+00 : f32
    %143 = vector.broadcast %cst_43 : f32 to vector<16x128xf32>
    %144 = arith.addf %143, %142 : vector<16x128xf32>
    %145 = arith.divf %143, %144 : vector<16x128xf32>
    %146 = vector.extract_strided_slice %133 {offsets = [0, 256], sizes = [16, 128], strides = [1, 1]} : vector<16x512xf32> to vector<16x128xf32>
    %147 = math.tanh %146 : vector<16x128xf32>
    %148 = vector.extract_strided_slice %133 {offsets = [0, 384], sizes = [16, 128], strides = [1, 1]} : vector<16x512xf32> to vector<16x128xf32>
    %149 = arith.negf %148 : vector<16x128xf32>
    %150 = math.exp %149 : vector<16x128xf32>
    %cst_44 = arith.constant 1.000000e+00 : f32
    %151 = vector.broadcast %cst_44 : f32 to vector<16x128xf32>
    %152 = arith.addf %151, %150 : vector<16x128xf32>
    %153 = arith.divf %151, %152 : vector<16x128xf32>
    %154 = arith.mulf %145, %126 : vector<16x128xf32>
    %155 = arith.mulf %139, %147 : vector<16x128xf32>
    %156 = arith.addf %154, %155 : vector<16x128xf32>
    %157 = math.tanh %156 : vector<16x128xf32>
    %158 = arith.mulf %153, %157 : vector<16x128xf32>
    %c80 = arith.constant 80 : index
    %c0_45 = arith.constant 0 : index
    %159 = vector.load %arg7[%c80, %c0_45] : memref<128x512xf32, #tpu.memory_space<vmem>>, vector<16x512xf32>
    %160 = arith.truncf %158 : vector<16x128xf32> to vector<16x128xbf16>
    %c0_46 = arith.constant 0 : index
    %c0_47 = arith.constant 0 : index
    %161 = vector.load %arg2[%c0_46, %c0_47] : memref<128x512xbf16, #tpu.memory_space<vmem>>, vector<128x512xbf16>
    %cst_48 = arith.constant dense<0.000000e+00> : vector<16x512xf32>
    %162 = tpu.matmul %160, %161, %cst_48 {dimension_numbers = #tpu.dot_dimension_numbers<[1], [0], [0], [1], [0, 0, 1, 1], [], []>} : vector<16x128xbf16>, vector<128x512xbf16>, vector<16x512xf32> -> vector<16x512xf32>
    %163 = arith.addf %159, %162 : vector<16x512xf32>
    %164 = vector.extract_strided_slice %163 {offsets = [0, 0], sizes = [16, 128], strides = [1, 1]} : vector<16x512xf32> to vector<16x128xf32>
    %165 = arith.negf %164 : vector<16x128xf32>
    %166 = math.exp %165 : vector<16x128xf32>
    %cst_49 = arith.constant 1.000000e+00 : f32
    %167 = vector.broadcast %cst_49 : f32 to vector<16x128xf32>
    %168 = arith.addf %167, %166 : vector<16x128xf32>
    %169 = arith.divf %167, %168 : vector<16x128xf32>
    %170 = vector.extract_strided_slice %163 {offsets = [0, 128], sizes = [16, 128], strides = [1, 1]} : vector<16x512xf32> to vector<16x128xf32>
    %171 = arith.negf %170 : vector<16x128xf32>
    %172 = math.exp %171 : vector<16x128xf32>
    %cst_50 = arith.constant 1.000000e+00 : f32
    %173 = vector.broadcast %cst_50 : f32 to vector<16x128xf32>
    %174 = arith.addf %173, %172 : vector<16x128xf32>
    %175 = arith.divf %173, %174 : vector<16x128xf32>
    %176 = vector.extract_strided_slice %163 {offsets = [0, 256], sizes = [16, 128], strides = [1, 1]} : vector<16x512xf32> to vector<16x128xf32>
    %177 = math.tanh %176 : vector<16x128xf32>
    %178 = vector.extract_strided_slice %163 {offsets = [0, 384], sizes = [16, 128], strides = [1, 1]} : vector<16x512xf32> to vector<16x128xf32>
    %179 = arith.negf %178 : vector<16x128xf32>
    %180 = math.exp %179 : vector<16x128xf32>
    %cst_51 = arith.constant 1.000000e+00 : f32
    %181 = vector.broadcast %cst_51 : f32 to vector<16x128xf32>
    %182 = arith.addf %181, %180 : vector<16x128xf32>
    %183 = arith.divf %181, %182 : vector<16x128xf32>
    %184 = arith.mulf %175, %156 : vector<16x128xf32>
    %185 = arith.mulf %169, %177 : vector<16x128xf32>
    %186 = arith.addf %184, %185 : vector<16x128xf32>
    %187 = math.tanh %186 : vector<16x128xf32>
    %188 = arith.mulf %183, %187 : vector<16x128xf32>
    %c96 = arith.constant 96 : index
    %c0_52 = arith.constant 0 : index
    %189 = vector.load %arg7[%c96, %c0_52] : memref<128x512xf32, #tpu.memory_space<vmem>>, vector<16x512xf32>
    %190 = arith.truncf %188 : vector<16x128xf32> to vector<16x128xbf16>
    %c0_53 = arith.constant 0 : index
    %c0_54 = arith.constant 0 : index
    %191 = vector.load %arg2[%c0_53, %c0_54] : memref<128x512xbf16, #tpu.memory_space<vmem>>, vector<128x512xbf16>
    %cst_55 = arith.constant dense<0.000000e+00> : vector<16x512xf32>
    %192 = tpu.matmul %190, %191, %cst_55 {dimension_numbers = #tpu.dot_dimension_numbers<[1], [0], [0], [1], [0, 0, 1, 1], [], []>} : vector<16x128xbf16>, vector<128x512xbf16>, vector<16x512xf32> -> vector<16x512xf32>
    %193 = arith.addf %189, %192 : vector<16x512xf32>
    %194 = vector.extract_strided_slice %193 {offsets = [0, 0], sizes = [16, 128], strides = [1, 1]} : vector<16x512xf32> to vector<16x128xf32>
    %195 = arith.negf %194 : vector<16x128xf32>
    %196 = math.exp %195 : vector<16x128xf32>
    %cst_56 = arith.constant 1.000000e+00 : f32
    %197 = vector.broadcast %cst_56 : f32 to vector<16x128xf32>
    %198 = arith.addf %197, %196 : vector<16x128xf32>
    %199 = arith.divf %197, %198 : vector<16x128xf32>
    %200 = vector.extract_strided_slice %193 {offsets = [0, 128], sizes = [16, 128], strides = [1, 1]} : vector<16x512xf32> to vector<16x128xf32>
    %201 = arith.negf %200 : vector<16x128xf32>
    %202 = math.exp %201 : vector<16x128xf32>
    %cst_57 = arith.constant 1.000000e+00 : f32
    %203 = vector.broadcast %cst_57 : f32 to vector<16x128xf32>
    %204 = arith.addf %203, %202 : vector<16x128xf32>
    %205 = arith.divf %203, %204 : vector<16x128xf32>
    %206 = vector.extract_strided_slice %193 {offsets = [0, 256], sizes = [16, 128], strides = [1, 1]} : vector<16x512xf32> to vector<16x128xf32>
    %207 = math.tanh %206 : vector<16x128xf32>
    %208 = vector.extract_strided_slice %193 {offsets = [0, 384], sizes = [16, 128], strides = [1, 1]} : vector<16x512xf32> to vector<16x128xf32>
    %209 = arith.negf %208 : vector<16x128xf32>
    %210 = math.exp %209 : vector<16x128xf32>
    %cst_58 = arith.constant 1.000000e+00 : f32
    %211 = vector.broadcast %cst_58 : f32 to vector<16x128xf32>
    %212 = arith.addf %211, %210 : vector<16x128xf32>
    %213 = arith.divf %211, %212 : vector<16x128xf32>
    %214 = arith.mulf %205, %186 : vector<16x128xf32>
    %215 = arith.mulf %199, %207 : vector<16x128xf32>
    %216 = arith.addf %214, %215 : vector<16x128xf32>
    %217 = math.tanh %216 : vector<16x128xf32>
    %218 = arith.mulf %213, %217 : vector<16x128xf32>
    %c112 = arith.constant 112 : index
    %c0_59 = arith.constant 0 : index
    %219 = vector.load %arg7[%c112, %c0_59] : memref<128x512xf32, #tpu.memory_space<vmem>>, vector<16x512xf32>
    %220 = arith.truncf %218 : vector<16x128xf32> to vector<16x128xbf16>
    %c0_60 = arith.constant 0 : index
    %c0_61 = arith.constant 0 : index
    %221 = vector.load %arg2[%c0_60, %c0_61] : memref<128x512xbf16, #tpu.memory_space<vmem>>, vector<128x512xbf16>
    %cst_62 = arith.constant dense<0.000000e+00> : vector<16x512xf32>
    %222 = tpu.matmul %220, %221, %cst_62 {dimension_numbers = #tpu.dot_dimension_numbers<[1], [0], [0], [1], [0, 0, 1, 1], [], []>} : vector<16x128xbf16>, vector<128x512xbf16>, vector<16x512xf32> -> vector<16x512xf32>
    %223 = arith.addf %219, %222 : vector<16x512xf32>
    %224 = vector.extract_strided_slice %223 {offsets = [0, 0], sizes = [16, 128], strides = [1, 1]} : vector<16x512xf32> to vector<16x128xf32>
    %225 = arith.negf %224 : vector<16x128xf32>
    %226 = math.exp %225 : vector<16x128xf32>
    %cst_63 = arith.constant 1.000000e+00 : f32
    %227 = vector.broadcast %cst_63 : f32 to vector<16x128xf32>
    %228 = arith.addf %227, %226 : vector<16x128xf32>
    %229 = arith.divf %227, %228 : vector<16x128xf32>
    %230 = vector.extract_strided_slice %223 {offsets = [0, 128], sizes = [16, 128], strides = [1, 1]} : vector<16x512xf32> to vector<16x128xf32>
    %231 = arith.negf %230 : vector<16x128xf32>
    %232 = math.exp %231 : vector<16x128xf32>
    %cst_64 = arith.constant 1.000000e+00 : f32
    %233 = vector.broadcast %cst_64 : f32 to vector<16x128xf32>
    %234 = arith.addf %233, %232 : vector<16x128xf32>
    %235 = arith.divf %233, %234 : vector<16x128xf32>
    %236 = vector.extract_strided_slice %223 {offsets = [0, 256], sizes = [16, 128], strides = [1, 1]} : vector<16x512xf32> to vector<16x128xf32>
    %237 = math.tanh %236 : vector<16x128xf32>
    %238 = vector.extract_strided_slice %223 {offsets = [0, 384], sizes = [16, 128], strides = [1, 1]} : vector<16x512xf32> to vector<16x128xf32>
    %239 = arith.negf %238 : vector<16x128xf32>
    %240 = math.exp %239 : vector<16x128xf32>
    %cst_65 = arith.constant 1.000000e+00 : f32
    %241 = vector.broadcast %cst_65 : f32 to vector<16x128xf32>
    %242 = arith.addf %241, %240 : vector<16x128xf32>
    %243 = arith.divf %241, %242 : vector<16x128xf32>
    %244 = arith.mulf %235, %216 : vector<16x128xf32>
    %245 = arith.mulf %229, %237 : vector<16x128xf32>
    %246 = arith.addf %244, %245 : vector<16x128xf32>
    %247 = math.tanh %246 : vector<16x128xf32>
    %248 = arith.mulf %243, %247 : vector<16x128xf32>
    %249 = arith.truncf %248 : vector<16x128xf32> to vector<16x128xbf16>
    %c0_66 = arith.constant 0 : index
    %c0_67 = arith.constant 0 : index
    %250 = vector.load %arg4[%c0_66, %c0_67] : memref<128x128xbf16, #tpu.memory_space<vmem>>, vector<128x128xbf16>
    %cst_68 = arith.constant dense<0.000000e+00> : vector<16x128xf32>
    %251 = tpu.matmul %249, %250, %cst_68 {dimension_numbers = #tpu.dot_dimension_numbers<[1], [0], [0], [1], [0, 0, 1, 1], [], []>} : vector<16x128xbf16>, vector<128x128xbf16>, vector<16x128xf32> -> vector<16x128xf32>
    %c0_69 = arith.constant 0 : index
    %c0_70 = arith.constant 0 : index
    %252 = vector.load %arg5[%c0_69, %c0_70] : memref<1x128xf32, #tpu.memory_space<vmem>>, vector<1x128xf32>
    %253 = vector.broadcast %252 : vector<1x128xf32> to vector<16x128xf32>
    %254 = arith.addf %251, %253 : vector<16x128xf32>
    %c0_71 = arith.constant 0 : index
    %c0_72 = arith.constant 0 : index
    %255 = vector.load %arg6[%c0_71, %c0_72] : memref<16x128xf32, #tpu.memory_space<vmem>>, vector<16x128xf32>
    tpu.vector_store %arg6[%c0_71, %c0_72], %254 {strides = array<i32>} : memref<16x128xf32, #tpu.memory_space<vmem>>, vector<16x128xf32>,
    return
  }
}

</mosaic_0001>

<llo_original>
// kernel: tpu_custom_call.1
$region0: #{tpu_custom_call.1}
  #allocation0 [shape = 'u32[]', space=smem, size = 0x4, offset = 0x4, fixed_abs, tag = 'smem constant byte address 0x4 - core index']
  #allocation1 [shape = 'u32[144,128]{1,0:T(1,128)}', space=vmem, size = 0x12000, scoped, tag = 'internal scratch']
  #allocation2 [shape = 'f32[128,512]{1,0:T(8,128)}', space=vmem, size = 0x40000, scoped, tag = 'scratch operand']
  %s0 = inlined_call_operand.hbm [shape: bf16[128,128], index: 0, kind: input, shape index: {}]
  %s1 = inlined_call_operand.hbm [shape: bf16[128,512], index: 1, kind: input, shape index: {}]
  %s2 = inlined_call_operand.hbm [shape: bf16[128,512], index: 2, kind: input, shape index: {}]
  %s3 = inlined_call_operand.vmem [shape: f32[1,512], index: 3, kind: input, shape index: {}]
  %s4 = inlined_call_operand.hbm [shape: bf16[128,128], index: 4, kind: input, shape index: {}]
  %s5 = inlined_call_operand.vmem [shape: f32[1,128], index: 5, kind: input, shape index: {}]
  %s6 = inlined_call_operand.hbm [shape: f32[16,128], index: 6, kind: output, shape index: {}]
  %s7 = sld [smem:[#allocation0]]
  $region50: #{tpu_custom_call.1} parent=0
    _
  %s9 = ssub.s32 1, %s7
  %s10 = scalar_select 0, %s9, %s7
  $region1: #{tpu_custom_call.1} parent=0
    #allocation3 [shape = 'u8[32768]{0}', space=vmem, size = 0x8000, scoped, tag = 'input window, operand 0, single buffered']
    #allocation4 [shape = 's32[1]{0}', space=sflag, size = 0x4, scoped, tag = 'scoped memory for tpu_custom_call.1']
    #allocation5 [shape = 's32[1]{0}', space=sflag, size = 0x4, scoped, tag = 'scoped memory for tpu_custom_call.1']
    #allocation6 [shape = 'u8[131072]{0}', space=vmem, size = 0x20000, scoped, tag = 'input window, operand 1, single buffered']
    #allocation7 [shape = 's32[1]{0}', space=sflag, size = 0x4, scoped, tag = 'scoped memory for tpu_custom_call.1']
    #allocation8 [shape = 'u8[131072]{0}', space=vmem, size = 0x20000, scoped, tag = 'input window, operand 2, single buffered']
    #allocation9 [shape = 'u8[32768]{0}', space=vmem, size = 0x8000, scoped, tag = 'input window, operand 4, single buffered']
    #allocation10 [shape = 's32[1]{0}', space=sflag, size = 0x4, scoped, tag = 'scoped memory for tpu_custom_call.1']
    #allocation11 [shape = 'u8[8192]{0}', space=vmem, size = 0x2000, scoped, tag = 'output window, operand 0, single buffered']
    %11 = vsyncpa [#allocation4], 0
    %12 = vsyncpa [#allocation7], 0
    %13 = vsyncpa [#allocation10], 0
    %14 = vsyncpa [#allocation5], 0
    // Predicated region
    $region2: #{tpu_custom_call.1} parent=1 // pred_check
      _
    $region3: #{tpu_custom_call.1} parent=1 // pred_check_branch
      %16 = sbr.rel (0) target = $region5
    $region4: #{tpu_custom_call.1} parent=1 // pred_region
      %s18 = ssub.s32 1024, 1024
      %19 = vsyncadd [#allocation4], %s18
      %s20 = sshll.u32 [#allocation3], 4
      %s21 = int_to_ptr.vmem [resolvable:$true] %s20
      %26 = dma.hbm_to_vmem [thread:$0]  %s0, 1024, %s21, [#allocation4], 64, 64, 4
    $region5: #{tpu_custom_call.1} parent=1 // pred_fallthru
      _
    // Predicated region
    $region6: #{tpu_custom_call.1} parent=1 // pred_check
      _
    $region7: #{tpu_custom_call.1} parent=1 // pred_check_branch
      %28 = sbr.rel (0) target = $region9
    $region8: #{tpu_custom_call.1} parent=1 // pred_region
      %s30 = ssub.s32 4096, 4096
      %31 = vsyncadd [#allocation7], %s30
      %s32 = sshll.u32 [#allocation6], 4
      %s33 = int_to_ptr.vmem [resolvable:$true] %s32
      %38 = dma.hbm_to_vmem [thread:$0]  %s1, 4096, %s33, [#allocation7], 256, 256, 16
    $region9: #{tpu_custom_call.1} parent=1 // pred_fallthru
      _
    // Predicated region
    $region10: #{tpu_custom_call.1} parent=1 // pred_check
      _
    $region11: #{tpu_custom_call.1} parent=1 // pred_check_branch
      %40 = sbr.rel (0) target = $region13
    $region12: #{tpu_custom_call.1} parent=1 // pred_region
      %s42 = ssub.s32 4096, 4096
      %43 = vsyncadd [#allocation7], %s42
      %s44 = sshll.u32 [#allocation8], 4
      %s45 = int_to_ptr.vmem [resolvable:$true] %s44
      %50 = dma.hbm_to_vmem [thread:$0]  %s2, 4096, %s45, [#allocation7], 256, 256, 16
    $region13: #{tpu_custom_call.1} parent=1 // pred_fallthru
      _
    // Predicated region
    $region14: #{tpu_custom_call.1} parent=1 // pred_check
      _
    $region15: #{tpu_custom_call.1} parent=1 // pred_check_branch
      %52 = sbr.rel (0) target = $region17
    $region16: #{tpu_custom_call.1} parent=1 // pred_region
      _
    $region17: #{tpu_custom_call.1} parent=1 // pred_fallthru
      _
    // Predicated region
    $region18: #{tpu_custom_call.1} parent=1 // pred_check
      _
    $region19: #{tpu_custom_call.1} parent=1 // pred_check_branch
      %54 = sbr.rel (0) target = $region21
    $region20: #{tpu_custom_call.1} parent=1 // pred_region
      %s56 = ssub.s32 1024, 1024
      %57 = vsyncadd [#allocation10], %s56
      %s58 = sshll.u32 [#allocation9], 4
      %s59 = int_to_ptr.vmem [resolvable:$true] %s58
      %64 = dma.hbm_to_vmem [thread:$0]  %s4, 1024, %s59, [#allocation10], 64, 64, 4
    $region21: #{tpu_custom_call.1} parent=1 // pred_fallthru
      _
    // Predicated region
    $region22: #{tpu_custom_call.1} parent=1 // pred_check
      _
    $region23: #{tpu_custom_call.1} parent=1 // pred_check_branch
      %66 = sbr.rel (0) target = $region25
    $region24: #{tpu_custom_call.1} parent=1 // pred_region
      _
    $region25: #{tpu_custom_call.1} parent=1 // pred_fallthru
      _
    // Predicated region
    $region26: #{tpu_custom_call.1} parent=1 // pred_check
      _
    $region27: #{tpu_custom_call.1} parent=1 // pred_check_branch
      %68 = sbr.rel (0) target = $region29
    $region28: #{tpu_custom_call.1} parent=1 // pred_region
      %69 = dma.done [#allocation4], 1024
    $region29: #{tpu_custom_call.1} parent=1 // pred_fallthru
      _
    // Predicated region
    $region30: #{tpu_custom_call.1} parent=1 // pred_check
      _
    $region31: #{tpu_custom_call.1} parent=1 // pred_check_branch
      %71 = sbr.rel (0) target = $region33
    $region32: #{tpu_custom_call.1} parent=1 // pred_region
      %72 = dma.done [#allocation7], 4096
    $region33: #{tpu_custom_call.1} parent=1 // pred_fallthru
      _
    // Predicated region
    $region34: #{tpu_custom_call.1} parent=1 // pred_check
      _
    $region35: #{tpu_custom_call.1} parent=1 // pred_check_branch
      %74 = sbr.rel (0) target = $region37
    $region36: #{tpu_custom_call.1} parent=1 // pred_region
      %75 = dma.done [#allocation7], 4096
    $region37: #{tpu_custom_call.1} parent=1 // pred_fallthru
      _
    // Predicated region
    $region38: #{tpu_custom_call.1} parent=1 // pred_check
      _
    $region39: #{tpu_custom_call.1} parent=1 // pred_check_branch
      %77 = sbr.rel (0) target = $region41
    $region40: #{tpu_custom_call.1} parent=1 // pred_region
      %78 = dma.done [#allocation10], 1024
    $region41: #{tpu_custom_call.1} parent=1 // pred_fallthru
      _
    %v80 = vld [vmem:[#allocation3] sm:$0xf]
    %v81 = vld [vmem:[#allocation3 + $0x4] sm:$0xf]
    %v82 = vld [vmem:[#allocation3 + $0x8] sm:$0xf]
    %v83 = vld [vmem:[#allocation3 + $0xc] sm:$0xf]
    %v84 = vld [vmem:[#allocation3 + $0x10] sm:$0xf]
    %v85 = vld [vmem:[#allocation3 + $0x14] sm:$0xf]
    %v86 = vld [vmem:[#allocation3 + $0x18] sm:$0xf]
    %v87 = vld [vmem:[#allocation3 + $0x1c] sm:$0xf]
    %v88 = vld [vmem:[#allocation3 + $0x20] sm:$0xf]
    %v89 = vld [vmem:[#allocation3 + $0x24] sm:$0xf]
    %v90 = vld [vmem:[#allocation3 + $0x28] sm:$0xf]
    %v91 = vld [vmem:[#allocation3 + $0x2c] sm:$0xf]
    %v92 = vld [vmem:[#allocation3 + $0x30] sm:$0xf]
    %v93 = vld [vmem:[#allocation3 + $0x34] sm:$0xf]
    %v94 = vld [vmem:[#allocation3 + $0x38] sm:$0xf]
    %v95 = vld [vmem:[#allocation3 + $0x3c] sm:$0xf]
    %v96 = vld [vmem:[#allocation6] sm:$0xff]
    %v97 = vld [vmem:[#allocation6 + $0x8] sm:$0xff]
    %v98 = vld [vmem:[#allocation6 + $0x10] sm:$0xff]
    %v99 = vld [vmem:[#allocation6 + $0x18] sm:$0xff]
    %v100 = vld [vmem:[#allocation6 + $0x20] sm:$0xff]
    %v101 = vld [vmem:[#allocation6 + $0x28] sm:$0xff]
    %v102 = vld [vmem:[#allocation6 + $0x30] sm:$0xff]
    %v103 = vld [vmem:[#allocation6 + $0x38] sm:$0xff]
    %v104 = vld [vmem:[#allocation6 + $0x40] sm:$0xff]
    %v105 = vld [vmem:[#allocation6 + $0x48] sm:$0xff]
    %v106 = vld [vmem:[#allocation6 + $0x50] sm:$0xff]
    %v107 = vld [vmem:[#allocation6 + $0x58] sm:$0xff]
    %v108 = vld [vmem:[#allocation6 + $0x60] sm:$0xff]
    %v109 = vld [vmem:[#allocation6 + $0x68] sm:$0xff]
    %v110 = vld [vmem:[#allocation6 + $0x70] sm:$0xff]
    %v111 = vld [vmem:[#allocation6 + $0x78] sm:$0xff]
    %v112 = vld [vmem:[#allocation6 + $0x80] sm:$0xff]
    %v113 = vld [vmem:[#allocation6 + $0x88] sm:$0xff]
    %v114 = vld [vmem:[#allocation6 + $0x90] sm:$0xff]
    %v115 = vld [vmem:[#allocation6 + $0x98] sm:$0xff]
    %v116 = vld [vmem:[#allocation6 + $0xa0] sm:$0xff]
    %v117 = vld [vmem:[#allocation6 + $0xa8] sm:$0xff]
    %v118 = vld [vmem:[#allocation6 + $0xb0] sm:$0xff]
    %v119 = vld [vmem:[#allocation6 + $0xb8] sm:$0xff]
    %v120 = vld [vmem:[#allocation6 + $0xc0] sm:$0xff]
    %v121 = vld [vmem:[#allocation6 + $0xc8] sm:$0xff]
    %v122 = vld [vmem:[#allocation6 + $0xd0] sm:$0xff]
    %v123 = vld [vmem:[#allocation6 + $0xd8] sm:$0xff]
    %v124 = vld [vmem:[#allocation6 + $0xe0] sm:$0xff]
    %v125 = vld [vmem:[#allocation6 + $0xe8] sm:$0xff]
    %v126 = vld [vmem:[#allocation6 + $0xf0] sm:$0xff]
    %v127 = vld [vmem:[#allocation6 + $0xf8] sm:$0xff]
    %v128 = vld [vmem:[%s3] sm:$0xf]
    %v130 = vlaneseq
    %v131 = vshrl.u32 %v130, 7
    %v132 = vsub.s32 0, %v131
    %v133 = vrot.slane %v128, %v132
    %v134 = vlaneseq
    %v135 = vshrl.u32 %v134, 7
    %v136 = vsub.s32 1, %v135
    %v137 = vrot.slane %v128, %v136
    %v138 = vlaneseq
    %v139 = vshrl.u32 %v138, 7
    %v140 = vsub.s32 2, %v139
    %v141 = vrot.slane %v128, %v140
    %v142 = vlaneseq
    %v143 = vshrl.u32 %v142, 7
    %v144 = vsub.s32 3, %v143
    %v145 = vrot.slane %v128, %v144
    %v166 = vunpack.c.l.b16 %v80
    %v167 = vunpack.c.l.b16 %v81
    %v168 = vunpack.c.l.b16 %v82
    %v169 = vunpack.c.l.b16 %v83
    %v170 = vunpack.c.l.b16 %v84
    %v171 = vunpack.c.l.b16 %v85
    %v172 = vunpack.c.l.b16 %v86
    %v173 = vunpack.c.l.b16 %v87
    %v174 = vunpack.c.l.b16 %v88
    %v175 = vunpack.c.l.b16 %v89
    %v176 = vunpack.c.l.b16 %v90
    %v177 = vunpack.c.l.b16 %v91
    %v178 = vunpack.c.l.b16 %v92
    %v179 = vunpack.c.l.b16 %v93
    %v180 = vunpack.c.l.b16 %v94
    %v181 = vunpack.c.l.b16 %v95
    %v182 = vpack.c.b16 %v167, %v166
    %v183 = vpack.c.b16 %v169, %v168
    %v184 = vpack.c.b16 %v171, %v170
    %v185 = vpack.c.b16 %v173, %v172
    %v186 = vpack.c.b16 %v175, %v174
    %v187 = vpack.c.b16 %v177, %v176
    %v188 = vpack.c.b16 %v179, %v178
    %v189 = vpack.c.b16 %v181, %v180
    %v230 = vunpack.c.l.b16 %v96
    %v231 = vunpack.c.h.b16 %v96
    %v232 = vunpack.c.l.b16 %v97
    %v233 = vunpack.c.h.b16 %v97
    %v234 = vunpack.c.l.b16 %v98
    %v235 = vunpack.c.h.b16 %v98
    %v236 = vunpack.c.l.b16 %v99
    %v237 = vunpack.c.h.b16 %v99
    %v238 = vunpack.c.l.b16 %v100
    %v239 = vunpack.c.h.b16 %v100
    %v240 = vunpack.c.l.b16 %v101
    %v241 = vunpack.c.h.b16 %v101
    %v242 = vunpack.c.l.b16 %v102
    %v243 = vunpack.c.h.b16 %v102
    %v244 = vunpack.c.l.b16 %v103
    %v245 = vunpack.c.h.b16 %v103
    %v246 = vunpack.c.l.b16 %v104
    %v247 = vunpack.c.h.b16 %v104
    %v248 = vunpack.c.l.b16 %v105
    %v249 = vunpack.c.h.b16 %v105
    %v250 = vunpack.c.l.b16 %v106
    %v251 = vunpack.c.h.b16 %v106
    %v252 = vunpack.c.l.b16 %v107
    %v253 = vunpack.c.h.b16 %v107
    %v254 = vunpack.c.l.b16 %v108
    %v255 = vunpack.c.h.b16 %v108
    %v256 = vunpack.c.l.b16 %v109
    %v257 = vunpack.c.h.b16 %v109
    %v258 = vunpack.c.l.b16 %v110
    %v259 = vunpack.c.h.b16 %v110
    %v260 = vunpack.c.l.b16 %v111
    %v261 = vunpack.c.h.b16 %v111
    %v262 = vunpack.c.l.b16 %v112
    %v263 = vunpack.c.h.b16 %v112
    %v264 = vunpack.c.l.b16 %v113
    %v265 = vunpack.c.h.b16 %v113
    %v266 = vunpack.c.l.b16 %v114
    %v267 = vunpack.c.h.b16 %v114
    %v268 = vunpack.c.l.b16 %v115
    %v269 = vunpack.c.h.b16 %v115
    %v270 = vunpack.c.l.b16 %v116
    %v271 = vunpack.c.h.b16 %v116
    %v272 = vunpack.c.l.b16 %v117
    %v273 = vunpack.c.h.b16 %v117
    %v274 = vunpack.c.l.b16 %v118
    %v275 = vunpack.c.h.b16 %v118
    %v276 = vunpack.c.l.b16 %v119
    %v277 = vunpack.c.h.b16 %v119
    %v278 = vunpack.c.l.b16 %v120
    %v279 = vunpack.c.h.b16 %v120
    %v280 = vunpack.c.l.b16 %v121
    %v281 = vunpack.c.h.b16 %v121
    %v282 = vunpack.c.l.b16 %v122
    %v283 = vunpack.c.h.b16 %v122
    %v284 = vunpack.c.l.b16 %v123
    %v285 = vunpack.c.h.b16 %v123
    %v286 = vunpack.c.l.b16 %v124
    %v287 = vunpack.c.h.b16 %v124
    %v288 = vunpack.c.l.b16 %v125
    %v289 = vunpack.c.h.b16 %v125
    %v290 = vunpack.c.l.b16 %v126
    %v291 = vunpack.c.h.b16 %v126
    %v292 = vunpack.c.l.b16 %v127
    %v293 = vunpack.c.h.b16 %v127
    %v294 = vpack.c.b16 %v234, %v230
    %v295 = vpack.c.b16 %v235, %v231
    %v296 = vpack.c.b16 %v236, %v232
    %v297 = vpack.c.b16 %v237, %v233
    %v298 = vpack.c.b16 %v242, %v238
    %v299 = vpack.c.b16 %v243, %v239
    %v300 = vpack.c.b16 %v244, %v240
    %v301 = vpack.c.b16 %v245, %v241
    %v302 = vpack.c.b16 %v250, %v246
    %v303 = vpack.c.b16 %v251, %v247
    %v304 = vpack.c.b16 %v252, %v248
    %v305 = vpack.c.b16 %v253, %v249
    %v306 = vpack.c.b16 %v258, %v254
    %v307 = vpack.c.b16 %v259, %v255
    %v308 = vpack.c.b16 %v260, %v256
    %v309 = vpack.c.b16 %v261, %v257
    %v310 = vpack.c.b16 %v266, %v262
    %v311 = vpack.c.b16 %v267, %v263
    %v312 = vpack.c.b16 %v268, %v264
    %v313 = vpack.c.b16 %v269, %v265
    %v314 = vpack.c.b16 %v274, %v270
    %v315 = vpack.c.b16 %v275, %v271
    %v316 = vpack.c.b16 %v276, %v272
    %v317 = vpack.c.b16 %v277, %v273
    %v318 = vpack.c.b16 %v282, %v278
    %v319 = vpack.c.b16 %v283, %v279
    %v320 = vpack.c.b16 %v284, %v280
    %v321 = vpack.c.b16 %v285, %v281
    %v322 = vpack.c.b16 %v290, %v286
    %v323 = vpack.c.b16 %v291, %v287
    %v324 = vpack.c.b16 %v292, %v288
    %v325 = vpack.c.b16 %v293, %v289
    %358 = vmatprep.subr.bf16.mxu0 %v323
    %359 = vmatpush1.bf16.msra.mxu0 %v322
    %360 = vmatprep.subr.bf16.mxu0 %v319
    %361 = vmatpush1.bf16.msra.mxu0 %v318
    %362 = vmatprep.subr.bf16.mxu0 %v315
    %363 = vmatpush1.bf16.msra.mxu0 %v314
    %364 = vmatprep.subr.bf16.mxu0 %v311
    %365 = vmatpush1.bf16.msra.mxu0 %v310
    %366 = vmatprep.subr.bf16.mxu0 %v307
    %367 = vmatpush1.bf16.msra.mxu0 %v306
    %368 = vmatprep.subr.bf16.mxu0 %v303
    %369 = vmatpush1.bf16.msra.mxu0 %v302
    %370 = vmatprep.subr.bf16.mxu0 %v299
    %371 = vmatpush1.bf16.msra.mxu0 %v298
    %372 = vmatprep.subr.bf16.mxu0 %v295
    %373 = vmatpush1.bf16.msra.mxu0 %v294
    %374 = vmatprep.subr.bf16.mxu0 0
    %375 = vmatpush2.bf16.msra.mxu0 0
    %376 = vmatprep.subr.bf16.mxu0 0
    %377 = vmatpush2.bf16.msra.mxu0 0
    %378 = vmatprep.subr.bf16.mxu0 0
    %379 = vmatpush2.bf16.msra.mxu0 0
    %380 = vmatprep.subr.bf16.mxu0 0
    %381 = vmatpush2.bf16.msra.mxu0 0
    %382 = vmatprep.subr.bf16.mxu0 0
    %383 = vmatpush2.bf16.msra.mxu0 0
    %384 = vmatprep.subr.bf16.mxu0 0
    %385 = vmatpush2.bf16.msra.mxu0 0
    %386 = vmatprep.subr.bf16.mxu0 0
    %387 = vmatpush2.bf16.msra.mxu0 0
    %388 = vmatprep.subr.bf16.mxu0 0
    %389 = vmatpush2.bf16.msra.mxu0 0
    %390 = vmatprep.mubr.bf16.mxu0 0
    %391 = vmatmul.mubr.bf16.gmra.mxu0 %v182
    %v392 = vpop.f32.mrf.mxu0
    %v393 = vadd.f32 %v133, %v392
    %v394 = vpop.f32.mrf.mxu0
    %v395 = vadd.f32 %v137, %v394
    %v396 = vpop.f32.mrf.mxu0
    %v397 = vadd.f32 %v133, %v396
    %v398 = vpop.f32.mrf.mxu0
    %v399 = vadd.f32 %v137, %v398
    %400 = vmatprep.mubr.bf16.mxu0 0
    %401 = vmatmul.mubr.bf16.gmra.mxu0 %v183
    %v402 = vpop.f32.mrf.mxu0
    %v403 = vadd.f32 %v133, %v402
    %v404 = vpop.f32.mrf.mxu0
    %v405 = vadd.f32 %v137, %v404
    %v406 = vpop.f32.mrf.mxu0
    %v407 = vadd.f32 %v133, %v406
    %v408 = vpop.f32.mrf.mxu0
    %v409 = vadd.f32 %v137, %v408
    %410 = vmatprep.mubr.bf16.mxu0 0
    %411 = vmatmul.mubr.bf16.gmra.mxu0 %v184
    %v412 = vpop.f32.mrf.mxu0
    %v413 = vadd.f32 %v133, %v412
    %v414 = vpop.f32.mrf.mxu0
    %v415 = vadd.f32 %v137, %v414
    %v416 = vpop.f32.mrf.mxu0
    %v417 = vadd.f32 %v133, %v416
    %v418 = vpop.f32.mrf.mxu0
    %v419 = vadd.f32 %v137, %v418
    %420 = vmatprep.mubr.bf16.mxu0 0
    %421 = vmatmul.mubr.bf16.gmra.mxu0 %v185
    %v422 = vpop.f32.mrf.mxu0
    %v423 = vadd.f32 %v133, %v422
    %v424 = vpop.f32.mrf.mxu0
    %v425 = vadd.f32 %v137, %v424
    %v426 = vpop.f32.mrf.mxu0
    %v427 = vadd.f32 %v133, %v426
    %v428 = vpop.f32.mrf.mxu0
    %v429 = vadd.f32 %v137, %v428
    %430 = vmatprep.mubr.bf16.mxu0 0
    %431 = vmatmul.mubr.bf16.gmra.mxu0 %v186
    %v432 = vpop.f32.mrf.mxu0
    %v433 = vadd.f32 %v133, %v432
    %v434 = vpop.f32.mrf.mxu0
    %v435 = vadd.f32 %v137, %v434
    %v436 = vpop.f32.mrf.mxu0
    %v437 = vadd.f32 %v133, %v436
    %v438 = vpop.f32.mrf.mxu0
    %v439 = vadd.f32 %v137, %v438
    %440 = vmatprep.mubr.bf16.mxu0 0
    %441 = vmatmul.mubr.bf16.gmra.mxu0 %v187
    %v442 = vpop.f32.mrf.mxu0
    %v443 = vadd.f32 %v133, %v442
    %v444 = vpop.f32.mrf.mxu0
    %v445 = vadd.f32 %v137, %v444
    %v446 = vpop.f32.mrf.mxu0
    %v447 = vadd.f32 %v133, %v446
    %v448 = vpop.f32.mrf.mxu0
    %v449 = vadd.f32 %v137, %v448
    %450 = vmatprep.mubr.bf16.mxu0 0
    %451 = vmatmul.mubr.bf16.gmra.mxu0 %v188
    %v452 = vpop.f32.mrf.mxu0
    %v453 = vadd.f32 %v133, %v452
    %v454 = vpop.f32.mrf.mxu0
    %v455 = vadd.f32 %v137, %v454
    %v456 = vpop.f32.mrf.mxu0
    %v457 = vadd.f32 %v133, %v456
    %v458 = vpop.f32.mrf.mxu0
    %v459 = vadd.f32 %v137, %v458
    %460 = vmatprep.mubr.bf16.mxu0 0
    %461 = vmatmul.mubr.bf16.gmra.mxu0 %v189
    %v462 = vpop.f32.mrf.mxu0
    %v463 = vadd.f32 %v133, %v462
    %v464 = vpop.f32.mrf.mxu0
    %v465 = vadd.f32 %v137, %v464
    %v466 = vpop.f32.mrf.mxu0
    %v467 = vadd.f32 %v133, %v466
    %v468 = vpop.f32.mrf.mxu0
    %v469 = vadd.f32 %v137, %v468
    %470 = vdwg.mxu0
    %471 = vmatprep.subr.bf16.mxu0 %v325
    %472 = vmatpush1.bf16.msra.mxu0 %v324
    %473 = vmatprep.subr.bf16.mxu0 %v321
    %474 = vmatpush1.bf16.msra.mxu0 %v320
    %475 = vmatprep.subr.bf16.mxu0 %v317
    %476 = vmatpush1.bf16.msra.mxu0 %v316
    %477 = vmatprep.subr.bf16.mxu0 %v313
    %478 = vmatpush1.bf16.msra.mxu0 %v312
    %479 = vmatprep.subr.bf16.mxu0 %v309
    %480 = vmatpush1.bf16.msra.mxu0 %v308
    %481 = vmatprep.subr.bf16.mxu0 %v305
    %482 = vmatpush1.bf16.msra.mxu0 %v304
    %483 = vmatprep.subr.bf16.mxu0 %v301
    %484 = vmatpush1.bf16.msra.mxu0 %v300
    %485 = vmatprep.subr.bf16.mxu0 %v297
    %486 = vmatpush1.bf16.msra.mxu0 %v296
    %487 = vmatprep.subr.bf16.mxu0 0
    %488 = vmatpush2.bf16.msra.mxu0 0
    %489 = vmatprep.subr.bf16.mxu0 0
    %490 = vmatpush2.bf16.msra.mxu0 0
    %491 = vmatprep.subr.bf16.mxu0 0
    %492 = vmatpush2.bf16.msra.mxu0 0
    %493 = vmatprep.subr.bf16.mxu0 0
    %494 = vmatpush2.bf16.msra.mxu0 0
    %495 = vmatprep.subr.bf16.mxu0 0
    %496 = vmatpush2.bf16.msra.mxu0 0
    %497 = vmatprep.subr.bf16.mxu0 0
    %498 = vmatpush2.bf16.msra.mxu0 0
    %499 = vmatprep.subr.bf16.mxu0 0
    %500 = vmatpush2.bf16.msra.mxu0 0
    %501 = vmatprep.subr.bf16.mxu0 0
    %502 = vmatpush2.bf16.msra.mxu0 0
    %503 = vmatprep.mubr.bf16.mxu0 0
    %504 = vmatmul.mubr.bf16.gmra.mxu0 %v182
    %v505 = vpop.f32.mrf.mxu0
    %v506 = vadd.f32 %v141, %v505
    %v507 = vpop.f32.mrf.mxu0
    %v508 = vadd.f32 %v145, %v507
    %v509 = vpop.f32.mrf.mxu0
    %v510 = vadd.f32 %v141, %v509
    %v511 = vpop.f32.mrf.mxu0
    %v512 = vadd.f32 %v145, %v511
    %513 = vmatprep.mubr.bf16.mxu0 0
    %514 = vmatmul.mubr.bf16.gmra.mxu0 %v183
    %v515 = vpop.f32.mrf.mxu0
    %v516 = vadd.f32 %v141, %v515
    %v517 = vpop.f32.mrf.mxu0
    %v518 = vadd.f32 %v145, %v517
    %v519 = vpop.f32.mrf.mxu0
    %v520 = vadd.f32 %v141, %v519
    %v521 = vpop.f32.mrf.mxu0
    %v522 = vadd.f32 %v145, %v521
    %523 = vmatprep.mubr.bf16.mxu0 0
    %524 = vmatmul.mubr.bf16.gmra.mxu0 %v184
    %v525 = vpop.f32.mrf.mxu0
    %v526 = vadd.f32 %v141, %v525
    %v527 = vpop.f32.mrf.mxu0
    %v528 = vadd.f32 %v145, %v527
    %v529 = vpop.f32.mrf.mxu0
    %v530 = vadd.f32 %v141, %v529
    %v531 = vpop.f32.mrf.mxu0
    %v532 = vadd.f32 %v145, %v531
    %533 = vmatprep.mubr.bf16.mxu0 0
    %534 = vmatmul.mubr.bf16.gmra.mxu0 %v185
    %v535 = vpop.f32.mrf.mxu0
    %v536 = vadd.f32 %v141, %v535
    %v537 = vpop.f32.mrf.mxu0
    %v538 = vadd.f32 %v145, %v537
    %v539 = vpop.f32.mrf.mxu0
    %v540 = vadd.f32 %v141, %v539
    %v541 = vpop.f32.mrf.mxu0
    %v542 = vadd.f32 %v145, %v541
    %543 = vmatprep.mubr.bf16.mxu0 0
    %544 = vmatmul.mubr.bf16.gmra.mxu0 %v186
    %v545 = vpop.f32.mrf.mxu0
    %v546 = vadd.f32 %v141, %v545
    %v547 = vpop.f32.mrf.mxu0
    %v548 = vadd.f32 %v145, %v547
    %v549 = vpop.f32.mrf.mxu0
    %v550 = vadd.f32 %v141, %v549
    %v551 = vpop.f32.mrf.mxu0
    %v552 = vadd.f32 %v145, %v551
    %553 = vmatprep.mubr.bf16.mxu0 0
    %554 = vmatmul.mubr.bf16.gmra.mxu0 %v187
    %v555 = vpop.f32.mrf.mxu0
    %v556 = vadd.f32 %v141, %v555
    %v557 = vpop.f32.mrf.mxu0
    %v558 = vadd.f32 %v145, %v557
    %v559 = vpop.f32.mrf.mxu0
    %v560 = vadd.f32 %v141, %v559
    %v561 = vpop.f32.mrf.mxu0
    %v562 = vadd.f32 %v145, %v561
    %563 = vmatprep.mubr.bf16.mxu0 0
    %564 = vmatmul.mubr.bf16.gmra.mxu0 %v188
    %v565 = vpop.f32.mrf.mxu0
    %v566 = vadd.f32 %v141, %v565
    %v567 = vpop.f32.mrf.mxu0
    %v568 = vadd.f32 %v145, %v567
    %v569 = vpop.f32.mrf.mxu0
    %v570 = vadd.f32 %v141, %v569
    %v571 = vpop.f32.mrf.mxu0
    %v572 = vadd.f32 %v145, %v571
    %573 = vmatprep.mubr.bf16.mxu0 0
    %574 = vmatmul.mubr.bf16.gmra.mxu0 %v189
    %v575 = vpop.f32.mrf.mxu0
    %v576 = vadd.f32 %v141, %v575
    %v577 = vpop.f32.mrf.mxu0
    %v578 = vadd.f32 %v145, %v577
    %v579 = vpop.f32.mrf.mxu0
    %v580 = vadd.f32 %v141, %v579
    %v581 = vpop.f32.mrf.mxu0
    %v582 = vadd.f32 %v145, %v581
    %583 = vdwg.mxu0
    %584 = vst [vmem:[#allocation2] sm:$0xff] %v393
    %585 = vst [vmem:[#allocation2 + $0x8] sm:$0xff] %v395
    %586 = vst [vmem:[#allocation2 + $0x10] sm:$0xff] %v506
    %587 = vst [vmem:[#allocation2 + $0x18] sm:$0xff] %v508
    %588 = vst [vmem:[#allocation2 + $0x20] sm:$0xff] %v397
    %589 = vst [vmem:[#allocation2 + $0x28] sm:$0xff] %v399
    %590 = vst [vmem:[#allocation2 + $0x30] sm:$0xff] %v510
    %591 = vst [vmem:[#allocation2 + $0x38] sm:$0xff] %v512
    %592 = vst [vmem:[#allocation2 + $0x40] sm:$0xff] %v403
    %593 = vst [vmem:[#allocation2 + $0x48] sm:$0xff] %v405
    %594 = vst [vmem:[#allocation2 + $0x50] sm:$0xff] %v516
    %595 = vst [vmem:[#allocation2 + $0x58] sm:$0xff] %v518
    %596 = vst [vmem:[#allocation2 + $0x60] sm:$0xff] %v407
    %597 = vst [vmem:[#allocation2 + $0x68] sm:$0xff] %v409
    %598 = vst [vmem:[#allocation2 + $0x70] sm:$0xff] %v520
    %599 = vst [vmem:[#allocation2 + $0x78] sm:$0xff] %v522
    %600 = vst [vmem:[#allocation2 + $0x80] sm:$0xff] %v413
    %601 = vst [vmem:[#allocation2 + $0x88] sm:$0xff] %v415
    %602 = vst [vmem:[#allocation2 + $0x90] sm:$0xff] %v526
    %603 = vst [vmem:[#allocation2 + $0x98] sm:$0xff] %v528
    %604 = vst [vmem:[#allocation2 + $0xa0] sm:$0xff] %v417
    %605 = vst [vmem:[#allocation2 + $0xa8] sm:$0xff] %v419
    %606 = vst [vmem:[#allocation2 + $0xb0] sm:$0xff] %v530
    %607 = vst [vmem:[#allocation2 + $0xb8] sm:$0xff] %v532
    %608 = vst [vmem:[#allocation2 + $0xc0] sm:$0xff] %v423
    %609 = vst [vmem:[#allocation2 + $0xc8] sm:$0xff] %v425
    %610 = vst [vmem:[#allocation2 + $0xd0] sm:$0xff] %v536
    %611 = vst [vmem:[#allocation2 + $0xd8] sm:$0xff] %v538
    %612 = vst [vmem:[#allocation2 + $0xe0] sm:$0xff] %v427
    %613 = vst [vmem:[#allocation2 + $0xe8] sm:$0xff] %v429
    %614 = vst [vmem:[#allocation2 + $0xf0] sm:$0xff] %v540
    %615 = vst [vmem:[#allocation2 + $0xf8] sm:$0xff] %v542
    %616 = vst [vmem:[#allocation2 + $0x100] sm:$0xff] %v433
    %617 = vst [vmem:[#allocation2 + $0x108] sm:$0xff] %v435
    %618 = vst [vmem:[#allocation2 + $0x110] sm:$0xff] %v546
    %619 = vst [vmem:[#allocation2 + $0x118] sm:$0xff] %v548
    %620 = vst [vmem:[#allocation2 + $0x120] sm:$0xff] %v437
    %621 = vst [vmem:[#allocation2 + $0x128] sm:$0xff] %v439
    %622 = vst [vmem:[#allocation2 + $0x130] sm:$0xff] %v550
    %623 = vst [vmem:[#allocation2 + $0x138] sm:$0xff] %v552
    %624 = vst [vmem:[#allocation2 + $0x140] sm:$0xff] %v443
    %625 = vst [vmem:[#allocation2 + $0x148] sm:$0xff] %v445
    %626 = vst [vmem:[#allocation2 + $0x150] sm:$0xff] %v556
    %627 = vst [vmem:[#allocation2 + $0x158] sm:$0xff] %v558
    %628 = vst [vmem:[#allocation2 + $0x160] sm:$0xff] %v447
    %629 = vst [vmem:[#allocation2 + $0x168] sm:$0xff] %v449
    %630 = vst [vmem:[#allocation2 + $0x170] sm:$0xff] %v560
    %631 = vst [vmem:[#allocation2 + $0x178] sm:$0xff] %v562
    %632 = vst [vmem:[#allocation2 + $0x180] sm:$0xff] %v453
    %633 = vst [vmem:[#allocation2 + $0x188] sm:$0xff] %v455
    %634 = vst [vmem:[#allocation2 + $0x190] sm:$0xff] %v566
    %635 = vst [vmem:[#allocation2 + $0x198] sm:$0xff] %v568
    %636 = vst [vmem:[#allocation2 + $0x1a0] sm:$0xff] %v457
    %637 = vst [vmem:[#allocation2 + $0x1a8] sm:$0xff] %v459
    %638 = vst [vmem:[#allocation2 + $0x1b0] sm:$0xff] %v570
    %639 = vst [vmem:[#allocation2 + $0x1b8] sm:$0xff] %v572
    %640 = vst [vmem:[#allocation2 + $0x1c0] sm:$0xff] %v463
    %641 = vst [vmem:[#allocation2 + $0x1c8] sm:$0xff] %v465
    %642 = vst [vmem:[#allocation2 + $0x1d0] sm:$0xff] %v576
    %643 = vst [vmem:[#allocation2 + $0x1d8] sm:$0xff] %v578
    %644 = vst [vmem:[#allocation2 + $0x1e0] sm:$0xff] %v467
    %645 = vst [vmem:[#allocation2 + $0x1e8] sm:$0xff] %v469
    %646 = vst [vmem:[#allocation2 + $0x1f0] sm:$0xff] %v580
    %647 = vst [vmem:[#allocation2 + $0x1f8] sm:$0xff] %v582
    %v648 = vld [vmem:[#allocation2] sm:$0xff]
    %v649 = vld [vmem:[#allocation2 + $0x8] sm:$0xff]
    %v650 = vld [vmem:[#allocation2 + $0x10] sm:$0xff]
    %v651 = vld [vmem:[#allocation2 + $0x18] sm:$0xff]
    %v652 = vld [vmem:[#allocation2 + $0x20] sm:$0xff]
    %v653 = vld [vmem:[#allocation2 + $0x28] sm:$0xff]
    %v654 = vld [vmem:[#allocation2 + $0x30] sm:$0xff]
    %v655 = vld [vmem:[#allocation2 + $0x38] sm:$0xff]
    %v656 = vld [vmem:[#allocation8] sm:$0xff]
    %v657 = vld [vmem:[#allocation8 + $0x8] sm:$0xff]
    %v658 = vld [vmem:[#allocation8 + $0x10] sm:$0xff]
    %v659 = vld [vmem:[#allocation8 + $0x18] sm:$0xff]
    %v660 = vld [vmem:[#allocation8 + $0x20] sm:$0xff]
    %v661 = vld [vmem:[#allocation8 + $0x28] sm:$0xff]
    %v662 = vld [vmem:[#allocation8 + $0x30] sm:$0xff]
    %v663 = vld [vmem:[#allocation8 + $0x38] sm:$0xff]
    %v664 = vld [vmem:[#allocation8 + $0x40] sm:$0xff]
    %v665 = vld [vmem:[#allocation8 + $0x48] sm:$0xff]
    %v666 = vld [vmem:[#allocation8 + $0x50] sm:$0xff]
    %v667 = vld [vmem:[#allocation8 + $0x58] sm:$0xff]
    %v668 = vld [vmem:[#allocation8 + $0x60] sm:$0xff]
    %v669 = vld [vmem:[#allocation8 + $0x68] sm:$0xff]
    %v670 = vld [vmem:[#allocation8 + $0x70] sm:$0xff]
    %v671 = vld [vmem:[#allocation8 + $0x78] sm:$0xff]
    %v672 = vld [vmem:[#allocation8 + $0x80] sm:$0xff]
    %v673 = vld [vmem:[#allocation8 + $0x88] sm:$0xff]
    %v674 = vld [vmem:[#allocation8 + $0x90] sm:$0xff]
    %v675 = vld [vmem:[#allocation8 + $0x98] sm:$0xff]
    %v676 = vld [vmem:[#allocation8 + $0xa0] sm:$0xff]
    %v677 = vld [vmem:[#allocation8 + $0xa8] sm:$0xff]
    %v678 = vld [vmem:[#allocation8 + $0xb0] sm:$0xff]
    %v679 = vld [vmem:[#allocation8 + $0xb8] sm:$0xff]
    %v680 = vld [vmem:[#allocation8 + $0xc0] sm:$0xff]
    %v681 = vld [vmem:[#allocation8 + $0xc8] sm:$0xff]
    %v682 = vld [vmem:[#allocation8 + $0xd0] sm:$0xff]
    %v683 = vld [vmem:[#allocation8 + $0xd8] sm:$0xff]
    %v684 = vld [vmem:[#allocation8 + $0xe0] sm:$0xff]
    %v685 = vld [vmem:[#allocation8 + $0xe8] sm:$0xff]
    %v686 = vld [vmem:[#allocation8 + $0xf0] sm:$0xff]
    %v687 = vld [vmem:[#allocation8 + $0xf8] sm:$0xff]
    %v720 = vunpack.c.l.b16 %v656
    %v721 = vunpack.c.h.b16 %v656
    %v722 = vunpack.c.l.b16 %v657
    %v723 = vunpack.c.h.b16 %v657
    %v724 = vunpack.c.l.b16 %v658
    %v725 = vunpack.c.h.b16 %v658
    %v726 = vunpack.c.l.b16 %v659
    %v727 = vunpack.c.h.b16 %v659
    %v728 = vunpack.c.l.b16 %v660
    %v729 = vunpack.c.h.b16 %v660
    %v730 = vunpack.c.l.b16 %v661
    %v731 = vunpack.c.h.b16 %v661
    %v732 = vunpack.c.l.b16 %v662
    %v733 = vunpack.c.h.b16 %v662
    %v734 = vunpack.c.l.b16 %v663
    %v735 = vunpack.c.h.b16 %v663
    %v736 = vunpack.c.l.b16 %v664
    %v737 = vunpack.c.h.b16 %v664
    %v738 = vunpack.c.l.b16 %v665
    %v739 = vunpack.c.h.b16 %v665
    %v740 = vunpack.c.l.b16 %v666
    %v741 = vunpack.c.h.b16 %v666
    %v742 = vunpack.c.l.b16 %v667
    %v743 = vunpack.c.h.b16 %v667
    %v744 = vunpack.c.l.b16 %v668
    %v745 = vunpack.c.h.b16 %v668
    %v746 = vunpack.c.l.b16 %v669
    %v747 = vunpack.c.h.b16 %v669
    %v748 = vunpack.c.l.b16 %v670
    %v749 = vunpack.c.h.b16 %v670
    %v750 = vunpack.c.l.b16 %v671
    %v751 = vunpack.c.h.b16 %v671
    %v752 = vunpack.c.l.b16 %v672
    %v753 = vunpack.c.h.b16 %v672
    %v754 = vunpack.c.l.b16 %v673
    %v755 = vunpack.c.h.b16 %v673
    %v756 = vunpack.c.l.b16 %v674
    %v757 = vunpack.c.h.b16 %v674
    %v758 = vunpack.c.l.b16 %v675
    %v759 = vunpack.c.h.b16 %v675
    %v760 = vunpack.c.l.b16 %v676
    %v761 = vunpack.c.h.b16 %v676
    %v762 = vunpack.c.l.b16 %v677
    %v763 = vunpack.c.h.b16 %v677
    %v764 = vunpack.c.l.b16 %v678
    %v765 = vunpack.c.h.b16 %v678
    %v766 = vunpack.c.l.b16 %v679
    %v767 = vunpack.c.h.b16 %v679
    %v768 = vunpack.c.l.b16 %v680
    %v769 = vunpack.c.h.b16 %v680
    %v770 = vunpack.c.l.b16 %v681
    %v771 = vunpack.c.h.b16 %v681
    %v772 = vunpack.c.l.b16 %v682
    %v773 = vunpack.c.h.b16 %v682
    %v774 = vunpack.c.l.b16 %v683
    %v775 = vunpack.c.h.b16 %v683
    %v776 = vunpack.c.l.b16 %v684
    %v777 = vunpack.c.h.b16 %v684
    %v778 = vunpack.c.l.b16 %v685
    %v779 = vunpack.c.h.b16 %v685
    %v780 = vunpack.c.l.b16 %v686
    %v781 = vunpack.c.h.b16 %v686
    %v782 = vunpack.c.l.b16 %v687
    %v783 = vunpack.c.h.b16 %v687
    %v784 = vpack.c.b16 %v724, %v720
    %v785 = vpack.c.b16 %v725, %v721
    %v786 = vpack.c.b16 %v726, %v722
    %v787 = vpack.c.b16 %v727, %v723
    %v788 = vpack.c.b16 %v732, %v728
    %v789 = vpack.c.b16 %v733, %v729
    %v790 = vpack.c.b16 %v734, %v730
    %v791 = vpack.c.b16 %v735, %v731
    %v792 = vpack.c.b16 %v740, %v736
    %v793 = vpack.c.b16 %v741, %v737
    %v794 = vpack.c.b16 %v742, %v738
    %v795 = vpack.c.b16 %v743, %v739
    %v796 = vpack.c.b16 %v748, %v744
    %v797 = vpack.c.b16 %v749, %v745
    %v798 = vpack.c.b16 %v750, %v746
    %v799 = vpack.c.b16 %v751, %v747
    %v800 = vpack.c.b16 %v756, %v752
    %v801 = vpack.c.b16 %v757, %v753
    %v802 = vpack.c.b16 %v758, %v754
    %v803 = vpack.c.b16 %v759, %v755
    %v804 = vpack.c.b16 %v764, %v760
    %v805 = vpack.c.b16 %v765, %v761
    %v806 = vpack.c.b16 %v766, %v762
    %v807 = vpack.c.b16 %v767, %v763
    %v808 = vpack.c.b16 %v772, %v768
    %v809 = vpack.c.b16 %v773, %v769
    %v810 = vpack.c.b16 %v774, %v770
    %v811 = vpack.c.b16 %v775, %v771
    %v812 = vpack.c.b16 %v780, %v776
    %v813 = vpack.c.b16 %v781, %v777
    %v814 = vpack.c.b16 %v782, %v778
    %v815 = vpack.c.b16 %v783, %v779
    %848 = vmatprep.subr.bf16.mxu0 %v813
    %849 = vmatpush1.bf16.msra.mxu0 %v812
    %850 = vmatprep.subr.bf16.mxu0 %v809
    %851 = vmatpush1.bf16.msra.mxu0 %v808
    %852 = vmatprep.subr.bf16.mxu0 %v805
    %853 = vmatpush1.bf16.msra.mxu0 %v804
    %854 = vmatprep.subr.bf16.mxu0 %v801
    %855 = vmatpush1.bf16.msra.mxu0 %v800
    %856 = vmatprep.subr.bf16.mxu0 %v797
    %857 = vmatpush1.bf16.msra.mxu0 %v796
    %858 = vmatprep.subr.bf16.mxu0 %v793
    %859 = vmatpush1.bf16.msra.mxu0 %v792
    %860 = vmatprep.subr.bf16.mxu0 %v789
    %861 = vmatpush1.bf16.msra.mxu0 %v788
    %862 = vmatprep.subr.bf16.mxu0 %v785
    %863 = vmatpush1.bf16.msra.mxu0 %v784
    %864 = vmatprep.subr.bf16.mxu0 0
    %865 = vmatpush2.bf16.msra.mxu0 0
    %866 = vmatprep.subr.bf16.mxu0 0
    %867 = vmatpush2.bf16.msra.mxu0 0
    %868 = vmatprep.subr.bf16.mxu0 0
    %869 = vmatpush2.bf16.msra.mxu0 0
    %870 = vmatprep.subr.bf16.mxu0 0
    %871 = vmatpush2.bf16.msra.mxu0 0
    %872 = vmatprep.subr.bf16.mxu0 0
    %873 = vmatpush2.bf16.msra.mxu0 0
    %874 = vmatprep.subr.bf16.mxu0 0
    %875 = vmatpush2.bf16.msra.mxu0 0
    %876 = vmatprep.subr.bf16.mxu0 0
    %877 = vmatpush2.bf16.msra.mxu0 0
    %878 = vmatprep.subr.bf16.mxu0 0
    %879 = vmatpush2.bf16.msra.mxu0 0
    %880 = vmatprep.mubr.bf16.mxu0 0
    %881 = vmatmul.mubr.bf16.gmra.mxu0 0
    %v882 = vpop.f32.mrf.mxu0
    %v883 = vadd.f32 0.0, %v882
    %v884 = vpop.f32.mrf.mxu0
    %v885 = vadd.f32 0.0, %v884
    %v886 = vpop.f32.mrf.mxu0
    %v887 = vadd.f32 0.0, %v886
    %v888 = vpop.f32.mrf.mxu0
    %v889 = vadd.f32 0.0, %v888
    %890 = vdwg.mxu0
    %891 = vmatprep.subr.bf16.mxu0 %v815
    %892 = vmatpush1.bf16.msra.mxu0 %v814
    %893 = vmatprep.subr.bf16.mxu0 %v811
    %894 = vmatpush1.bf16.msra.mxu0 %v810
    %895 = vmatprep.subr.bf16.mxu0 %v807
    %896 = vmatpush1.bf16.msra.mxu0 %v806
    %897 = vmatprep.subr.bf16.mxu0 %v803
    %898 = vmatpush1.bf16.msra.mxu0 %v802
    %899 = vmatprep.subr.bf16.mxu0 %v799
    %900 = vmatpush1.bf16.msra.mxu0 %v798
    %901 = vmatprep.subr.bf16.mxu0 %v795
    %902 = vmatpush1.bf16.msra.mxu0 %v794
    %903 = vmatprep.subr.bf16.mxu0 %v791
    %904 = vmatpush1.bf16.msra.mxu0 %v790
    %905 = vmatprep.subr.bf16.mxu0 %v787
    %906 = vmatpush1.bf16.msra.mxu0 %v786
    %907 = vmatprep.subr.bf16.mxu0 0
    %908 = vmatpush2.bf16.msra.mxu0 0
    %909 = vmatprep.subr.bf16.mxu0 0
    %910 = vmatpush2.bf16.msra.mxu0 0
    %911 = vmatprep.subr.bf16.mxu0 0
    %912 = vmatpush2.bf16.msra.mxu0 0
    %913 = vmatprep.subr.bf16.mxu0 0
    %914 = vmatpush2.bf16.msra.mxu0 0
    %915 = vmatprep.subr.bf16.mxu0 0
    %916 = vmatpush2.bf16.msra.mxu0 0
    %917 = vmatprep.subr.bf16.mxu0 0
    %918 = vmatpush2.bf16.msra.mxu0 0
    %919 = vmatprep.subr.bf16.mxu0 0
    %920 = vmatpush2.bf16.msra.mxu0 0
    %921 = vmatprep.subr.bf16.mxu0 0
    %922 = vmatpush2.bf16.msra.mxu0 0
    %923 = vmatprep.mubr.bf16.mxu0 0
    %924 = vmatmul.mubr.bf16.gmra.mxu0 0
    %v925 = vpop.f32.mrf.mxu0
    %v926 = vadd.f32 0.0, %v925
    %v927 = vpop.f32.mrf.mxu0
    %v928 = vadd.f32 0.0, %v927
    %v929 = vpop.f32.mrf.mxu0
    %v930 = vadd.f32 0.0, %v929
    %v931 = vpop.f32.mrf.mxu0
    %v932 = vadd.f32 0.0, %v931
    %933 = vdwg.mxu0
    %v934 = vadd.f32 %v648, %v883
    %v935 = vadd.f32 %v649, %v885
    %v936 = vadd.f32 %v650, %v926
    %v937 = vadd.f32 %v651, %v928
    %v938 = vadd.f32 %v652, %v887
    %v939 = vadd.f32 %v653, %v889
    %v940 = vadd.f32 %v654, %v930
    %v941 = vadd.f32 %v655, %v932
    %v942 = vxor.u32 %v934, 2147483648
    %v943 = vxor.u32 %v938, 2147483648
    %v944 = vmul.f32 %v942, 1.442695
    %v945 = vpow.pop %v944
    %v946 = vmul.f32 %v943, 1.442695
    %v947 = vpow.pop %v946
    %v948 = vadd.f32 %v945, 1.0
    %v949 = vadd.f32 %v947, 1.0
    %v950 = vrcp.pop %v948
    %v951 = vmul.f32 1.0, %v950
    %v952 = vrcp.pop %v949
    %v953 = vmul.f32 1.0, %v952
    %v954 = vxor.u32 %v935, 2147483648
    %v955 = vxor.u32 %v939, 2147483648
    %v956 = vmul.f32 %v954, 1.442695
    %v957 = vpow.pop %v956
    %v958 = vmul.f32 %v955, 1.442695
    %v959 = vpow.pop %v958
    %v960 = vadd.f32 %v957, 1.0
    %v961 = vadd.f32 %v959, 1.0
    %v962 = vrcp.pop %v960
    %v963 = vmul.f32 1.0, %v962
    %v964 = vrcp.pop %v961
    %v965 = vmul.f32 1.0, %v964
    %v966 = vtanh.pop %v936
    %v967 = vtanh.pop %v940
    %v968 = vxor.u32 %v937, 2147483648
    %v969 = vxor.u32 %v941, 2147483648
    %v970 = vmul.f32 %v968, 1.442695
    %v971 = vpow.pop %v970
    %v972 = vmul.f32 %v969, 1.442695
    %v973 = vpow.pop %v972
    %v974 = vadd.f32 %v971, 1.0
    %v975 = vadd.f32 %v973, 1.0
    %v976 = vrcp.pop %v974
    %v977 = vmul.f32 1.0, %v976
    %v978 = vrcp.pop %v975
    %v979 = vmul.f32 1.0, %v978
    %v980 = vmul.f32 %v963, 0.0
    %v981 = vmul.f32 %v965, 0.0
    %v982 = vmul.f32 %v951, %v966
    %v983 = vmul.f32 %v953, %v967
    %v984 = vadd.f32 %v980, %v982
    %v985 = vadd.f32 %v981, %v983
    %v986 = vtanh.pop %v984
    %v987 = vtanh.pop %v985
    %v988 = vmul.f32 %v977, %v986
    %v989 = vmul.f32 %v979, %v987
    %v990 = vld [vmem:[#allocation2 + $0x40] sm:$0xff]
    %v991 = vld [vmem:[#allocation2 + $0x48] sm:$0xff]
    %v992 = vld [vmem:[#allocation2 + $0x50] sm:$0xff]
    %v993 = vld [vmem:[#allocation2 + $0x58] sm:$0xff]
    %v994 = vld [vmem:[#allocation2 + $0x60] sm:$0xff]
    %v995 = vld [vmem:[#allocation2 + $0x68] sm:$0xff]
    %v996 = vld [vmem:[#allocation2 + $0x70] sm:$0xff]
    %v997 = vld [vmem:[#allocation2 + $0x78] sm:$0xff]
    %v998 = vpack.c.bf16 %v989, %v988
    %999 = vmatprep.subr.bf16.mxu0 %v813
    %1000 = vmatpush1.bf16.msra.mxu0 %v812
    %1001 = vmatprep.subr.bf16.mxu0 %v809
    %1002 = vmatpush1.bf16.msra.mxu0 %v808
    %1003 = vmatprep.subr.bf16.mxu0 %v805
    %1004 = vmatpush1.bf16.msra.mxu0 %v804
    %1005 = vmatprep.subr.bf16.mxu0 %v801
    %1006 = vmatpush1.bf16.msra.mxu0 %v800
    %1007 = vmatprep.subr.bf16.mxu0 %v797
    %1008 = vmatpush1.bf16.msra.mxu0 %v796
    %1009 = vmatprep.subr.bf16.mxu0 %v793
    %1010 = vmatpush1.bf16.msra.mxu0 %v792
    %1011 = vmatprep.subr.bf16.mxu0 %v789
    %1012 = vmatpush1.bf16.msra.mxu0 %v788
    %1013 = vmatprep.subr.bf16.mxu0 %v785
    %1014 = vmatpush1.bf16.msra.mxu0 %v784
    %1015 = vmatprep.subr.bf16.mxu0 0
    %1016 = vmatpush2.bf16.msra.mxu0 0
    %1017 = vmatprep.subr.bf16.mxu0 0
    %1018 = vmatpush2.bf16.msra.mxu0 0
    %1019 = vmatprep.subr.bf16.mxu0 0
    %1020 = vmatpush2.bf16.msra.mxu0 0
    %1021 = vmatprep.subr.bf16.mxu0 0
    %1022 = vmatpush2.bf16.msra.mxu0 0
    %1023 = vmatprep.subr.bf16.mxu0 0
    %1024 = vmatpush2.bf16.msra.mxu0 0
    %1025 = vmatprep.subr.bf16.mxu0 0
    %1026 = vmatpush2.bf16.msra.mxu0 0
    %1027 = vmatprep.subr.bf16.mxu0 0
    %1028 = vmatpush2.bf16.msra.mxu0 0
    %1029 = vmatprep.subr.bf16.mxu0 0
    %1030 = vmatpush2.bf16.msra.mxu0 0
    %1031 = vmatprep.mubr.bf16.mxu0 0
    %1032 = vmatmul.mubr.bf16.gmra.mxu0 %v998
    %v1033 = vpop.f32.mrf.mxu0
    %v1034 = vadd.f32 0.0, %v1033
    %v1035 = vpop.f32.mrf.mxu0
    %v1036 = vadd.f32 0.0, %v1035
    %v1037 = vpop.f32.mrf.mxu0
    %v1038 = vadd.f32 0.0, %v1037
    %v1039 = vpop.f32.mrf.mxu0
    %v1040 = vadd.f32 0.0, %v1039
    %1041 = vdwg.mxu0
    %1042 = vmatprep.subr.bf16.mxu0 %v815
    %1043 = vmatpush1.bf16.msra.mxu0 %v814
    %1044 = vmatprep.subr.bf16.mxu0 %v811
    %1045 = vmatpush1.bf16.msra.mxu0 %v810
    %1046 = vmatprep.subr.bf16.mxu0 %v807
    %1047 = vmatpush1.bf16.msra.mxu0 %v806
    %1048 = vmatprep.subr.bf16.mxu0 %v803
    %1049 = vmatpush1.bf16.msra.mxu0 %v802
    %1050 = vmatprep.subr.bf16.mxu0 %v799
    %1051 = vmatpush1.bf16.msra.mxu0 %v798
    %1052 = vmatprep.subr.bf16.mxu0 %v795
    %1053 = vmatpush1.bf16.msra.mxu0 %v794
    %1054 = vmatprep.subr.bf16.mxu0 %v791
    %1055 = vmatpush1.bf16.msra.mxu0 %v790
    %1056 = vmatprep.subr.bf16.mxu0 %v787
    %1057 = vmatpush1.bf16.msra.mxu0 %v786
    %1058 = vmatprep.subr.bf16.mxu0 0
    %1059 = vmatpush2.bf16.msra.mxu0 0
    %1060 = vmatprep.subr.bf16.mxu0 0
    %1061 = vmatpush2.bf16.msra.mxu0 0
    %1062 = vmatprep.subr.bf16.mxu0 0
    %1063 = vmatpush2.bf16.msra.mxu0 0
    %1064 = vmatprep.subr.bf16.mxu0 0
    %1065 = vmatpush2.bf16.msra.mxu0 0
    %1066 = vmatprep.subr.bf16.mxu0 0
    %1067 = vmatpush2.bf16.msra.mxu0 0
    %1068 = vmatprep.subr.bf16.mxu0 0
    %1069 = vmatpush2.bf16.msra.mxu0 0
    %1070 = vmatprep.subr.bf16.mxu0 0
    %1071 = vmatpush2.bf16.msra.mxu0 0
    %1072 = vmatprep.subr.bf16.mxu0 0
    %1073 = vmatpush2.bf16.msra.mxu0 0
    %1074 = vmatprep.mubr.bf16.mxu0 0
    %1075 = vmatmul.mubr.bf16.gmra.mxu0 %v998
    %v1076 = vpop.f32.mrf.mxu0
    %v1077 = vadd.f32 0.0, %v1076
    %v1078 = vpop.f32.mrf.mxu0
    %v1079 = vadd.f32 0.0, %v1078
    %v1080 = vpop.f32.mrf.mxu0
    %v1081 = vadd.f32 0.0, %v1080
    %v1082 = vpop.f32.mrf.mxu0
    %v1083 = vadd.f32 0.0, %v1082
    %1084 = vdwg.mxu0
    %v1085 = vadd.f32 %v990, %v1034
    %v1086 = vadd.f32 %v991, %v1036
    %v1087 = vadd.f32 %v992, %v1077
    %v1088 = vadd.f32 %v993, %v1079
    %v1089 = vadd.f32 %v994, %v1038
    %v1090 = vadd.f32 %v995, %v1040
    %v1091 = vadd.f32 %v996, %v1081
    %v1092 = vadd.f32 %v997, %v1083
    %v1093 = vxor.u32 %v1085, 2147483648
    %v1094 = vxor.u32 %v1089, 2147483648
    %v1095 = vmul.f32 %v1093, 1.442695
    %v1096 = vpow.pop %v1095
    %v1097 = vmul.f32 %v1094, 1.442695
    %v1098 = vpow.pop %v1097
    %v1099 = vadd.f32 %v1096, 1.0
    %v1100 = vadd.f32 %v1098, 1.0
    %v1101 = vrcp.pop %v1099
    %v1102 = vmul.f32 1.0, %v1101
    %v1103 = vrcp.pop %v1100
    %v1104 = vmul.f32 1.0, %v1103
    %v1105 = vxor.u32 %v1086, 2147483648
    %v1106 = vxor.u32 %v1090, 2147483648
    %v1107 = vmul.f32 %v1105, 1.442695
    %v1108 = vpow.pop %v1107
    %v1109 = vmul.f32 %v1106, 1.442695
    %v1110 = vpow.pop %v1109
    %v1111 = vadd.f32 %v1108, 1.0
    %v1112 = vadd.f32 %v1110, 1.0
    %v1113 = vrcp.pop %v1111
    %v1114 = vmul.f32 1.0, %v1113
    %v1115 = vrcp.pop %v1112
    %v1116 = vmul.f32 1.0, %v1115
    %v1117 = vtanh.pop %v1087
    %v1118 = vtanh.pop %v1091
    %v1119 = vxor.u32 %v1088, 2147483648
    %v1120 = vxor.u32 %v1092, 2147483648
    %v1121 = vmul.f32 %v1119, 1.442695
    %v1122 = vpow.pop %v1121
    %v1123 = vmul.f32 %v1120, 1.442695
    %v1124 = vpow.pop %v1123
    %v1125 = vadd.f32 %v1122, 1.0
    %v1126 = vadd.f32 %v1124, 1.0
    %v1127 = vrcp.pop %v1125
    %v1128 = vmul.f32 1.0, %v1127
    %v1129 = vrcp.pop %v1126
    %v1130 = vmul.f32 1.0, %v1129
    %v1131 = vmul.f32 %v1114, %v984
    %v1132 = vmul.f32 %v1116, %v985
    %v1133 = vmul.f32 %v1102, %v1117
    %v1134 = vmul.f32 %v1104, %v1118
    %v1135 = vadd.f32 %v1131, %v1133
    %v1136 = vadd.f32 %v1132, %v1134
    %v1137 = vtanh.pop %v1135
    %v1138 = vtanh.pop %v1136
    %v1139 = vmul.f32 %v1128, %v1137
    %v1140 = vmul.f32 %v1130, %v1138
    %v1141 = vld [vmem:[#allocation2 + $0x80] sm:$0xff]
    %v1142 = vld [vmem:[#allocation2 + $0x88] sm:$0xff]
    %v1143 = vld [vmem:[#allocation2 + $0x90] sm:$0xff]
    %v1144 = vld [vmem:[#allocation2 + $0x98] sm:$0xff]
    %v1145 = vld [vmem:[#allocation2 + $0xa0] sm:$0xff]
    %v1146 = vld [vmem:[#allocation2 + $0xa8] sm:$0xff]
    %v1147 = vld [vmem:[#allocation2 + $0xb0] sm:$0xff]
    %v1148 = vld [vmem:[#allocation2 + $0xb8] sm:$0xff]
    %v1149 = vpack.c.bf16 %v1140, %v1139
    %1150 = vmatprep.subr.bf16.mxu0 %v813
    %1151 = vmatpush1.bf16.msra.mxu0 %v812
    %1152 = vmatprep.subr.bf16.mxu0 %v809
    %1153 = vmatpush1.bf16.msra.mxu0 %v808
    %1154 = vmatprep.subr.bf16.mxu0 %v805
    %1155 = vmatpush1.bf16.msra.mxu0 %v804
    %1156 = vmatprep.subr.bf16.mxu0 %v801
    %1157 = vmatpush1.bf16.msra.mxu0 %v800
    %1158 = vmatprep.subr.bf16.mxu0 %v797
    %1159 = vmatpush1.bf16.msra.mxu0 %v796
    %1160 = vmatprep.subr.bf16.mxu0 %v793
    %1161 = vmatpush1.bf16.msra.mxu0 %v792
    %1162 = vmatprep.subr.bf16.mxu0 %v789
    %1163 = vmatpush1.bf16.msra.mxu0 %v788
    %1164 = vmatprep.subr.bf16.mxu0 %v785
    %1165 = vmatpush1.bf16.msra.mxu0 %v784
    %1166 = vmatprep.subr.bf16.mxu0 0
    %1167 = vmatpush2.bf16.msra.mxu0 0
    %1168 = vmatprep.subr.bf16.mxu0 0
    %1169 = vmatpush2.bf16.msra.mxu0 0
    %1170 = vmatprep.subr.bf16.mxu0 0
    %1171 = vmatpush2.bf16.msra.mxu0 0
    %1172 = vmatprep.subr.bf16.mxu0 0
    %1173 = vmatpush2.bf16.msra.mxu0 0
    %1174 = vmatprep.subr.bf16.mxu0 0
    %1175 = vmatpush2.bf16.msra.mxu0 0
    %1176 = vmatprep.subr.bf16.mxu0 0
    %1177 = vmatpush2.bf16.msra.mxu0 0
    %1178 = vmatprep.subr.bf16.mxu0 0
    %1179 = vmatpush2.bf16.msra.mxu0 0
    %1180 = vmatprep.subr.bf16.mxu0 0
    %1181 = vmatpush2.bf16.msra.mxu0 0
    %1182 = vmatprep.mubr.bf16.mxu0 0
    %1183 = vmatmul.mubr.bf16.gmra.mxu0 %v1149
    %v1184 = vpop.f32.mrf.mxu0
    %v1185 = vadd.f32 0.0, %v1184
    %v1186 = vpop.f32.mrf.mxu0
    %v1187 = vadd.f32 0.0, %v1186
    %v1188 = vpop.f32.mrf.mxu0
    %v1189 = vadd.f32 0.0, %v1188
    %v1190 = vpop.f32.mrf.mxu0
    %v1191 = vadd.f32 0.0, %v1190
    %1192 = vdwg.mxu0
    %1193 = vmatprep.subr.bf16.mxu0 %v815
    %1194 = vmatpush1.bf16.msra.mxu0 %v814
    %1195 = vmatprep.subr.bf16.mxu0 %v811
    %1196 = vmatpush1.bf16.msra.mxu0 %v810
    %1197 = vmatprep.subr.bf16.mxu0 %v807
    %1198 = vmatpush1.bf16.msra.mxu0 %v806
    %1199 = vmatprep.subr.bf16.mxu0 %v803
    %1200 = vmatpush1.bf16.msra.mxu0 %v802
    %1201 = vmatprep.subr.bf16.mxu0 %v799
    %1202 = vmatpush1.bf16.msra.mxu0 %v798
    %1203 = vmatprep.subr.bf16.mxu0 %v795
    %1204 = vmatpush1.bf16.msra.mxu0 %v794
    %1205 = vmatprep.subr.bf16.mxu0 %v791
    %1206 = vmatpush1.bf16.msra.mxu0 %v790
    %1207 = vmatprep.subr.bf16.mxu0 %v787
    %1208 = vmatpush1.bf16.msra.mxu0 %v786
    %1209 = vmatprep.subr.bf16.mxu0 0
    %1210 = vmatpush2.bf16.msra.mxu0 0
    %1211 = vmatprep.subr.bf16.mxu0 0
    %1212 = vmatpush2.bf16.msra.mxu0 0
    %1213 = vmatprep.subr.bf16.mxu0 0
    %1214 = vmatpush2.bf16.msra.mxu0 0
    %1215 = vmatprep.subr.bf16.mxu0 0
    %1216 = vmatpush2.bf16.msra.mxu0 0
    %1217 = vmatprep.subr.bf16.mxu0 0
    %1218 = vmatpush2.bf16.msra.mxu0 0
    %1219 = vmatprep.subr.bf16.mxu0 0
    %1220 = vmatpush2.bf16.msra.mxu0 0
    %1221 = vmatprep.subr.bf16.mxu0 0
    %1222 = vmatpush2.bf16.msra.mxu0 0
    %1223 = vmatprep.subr.bf16.mxu0 0
    %1224 = vmatpush2.bf16.msra.mxu0 0
    %1225 = vmatprep.mubr.bf16.mxu0 0
    %1226 = vmatmul.mubr.bf16.gmra.mxu0 %v1149
    %v1227 = vpop.f32.mrf.mxu0
    %v1228 = vadd.f32 0.0, %v1227
    %v1229 = vpop.f32.mrf.mxu0
    %v1230 = vadd.f32 0.0, %v1229
    %v1231 = vpop.f32.mrf.mxu0
    %v1232 = vadd.f32 0.0, %v1231
    %v1233 = vpop.f32.mrf.mxu0
    %v1234 = vadd.f32 0.0, %v1233
    %1235 = vdwg.mxu0
    %v1236 = vadd.f32 %v1141, %v1185
    %v1237 = vadd.f32 %v1142, %v1187
    %v1238 = vadd.f32 %v1143, %v1228
    %v1239 = vadd.f32 %v1144, %v1230
    %v1240 = vadd.f32 %v1145, %v1189
    %v1241 = vadd.f32 %v1146, %v1191
    %v1242 = vadd.f32 %v1147, %v1232
    %v1243 = vadd.f32 %v1148, %v1234
    %v1244 = vxor.u32 %v1236, 2147483648
    %v1245 = vxor.u32 %v1240, 2147483648
    %v1246 = vmul.f32 %v1244, 1.442695
    %v1247 = vpow.pop %v1246
    %v1248 = vmul.f32 %v1245, 1.442695
    %v1249 = vpow.pop %v1248
    %v1250 = vadd.f32 %v1247, 1.0
    %v1251 = vadd.f32 %v1249, 1.0
    %v1252 = vrcp.pop %v1250
    %v1253 = vmul.f32 1.0, %v1252
    %v1254 = vrcp.pop %v1251
    %v1255 = vmul.f32 1.0, %v1254
    %v1256 = vxor.u32 %v1237, 2147483648
    %v1257 = vxor.u32 %v1241, 2147483648
    %v1258 = vmul.f32 %v1256, 1.442695
    %v1259 = vpow.pop %v1258
    %v1260 = vmul.f32 %v1257, 1.442695
    %v1261 = vpow.pop %v1260
    %v1262 = vadd.f32 %v1259, 1.0
    %v1263 = vadd.f32 %v1261, 1.0
    %v1264 = vrcp.pop %v1262
    %v1265 = vmul.f32 1.0, %v1264
    %v1266 = vrcp.pop %v1263
    %v1267 = vmul.f32 1.0, %v1266
    %v1268 = vtanh.pop %v1238
    %v1269 = vtanh.pop %v1242
    %v1270 = vxor.u32 %v1239, 2147483648
    %v1271 = vxor.u32 %v1243, 2147483648
    %v1272 = vmul.f32 %v1270, 1.442695
    %v1273 = vpow.pop %v1272
    %v1274 = vmul.f32 %v1271, 1.442695
    %v1275 = vpow.pop %v1274
    %v1276 = vadd.f32 %v1273, 1.0
    %v1277 = vadd.f32 %v1275, 1.0
    %v1278 = vrcp.pop %v1276
    %v1279 = vmul.f32 1.0, %v1278
    %v1280 = vrcp.pop %v1277
    %v1281 = vmul.f32 1.0, %v1280
    %v1282 = vmul.f32 %v1265, %v1135
    %v1283 = vmul.f32 %v1267, %v1136
    %v1284 = vmul.f32 %v1253, %v1268
    %v1285 = vmul.f32 %v1255, %v1269
    %v1286 = vadd.f32 %v1282, %v1284
    %v1287 = vadd.f32 %v1283, %v1285
    %v1288 = vtanh.pop %v1286
    %v1289 = vtanh.pop %v1287
    %v1290 = vmul.f32 %v1279, %v1288
    %v1291 = vmul.f32 %v1281, %v1289
    %v1292 = vld [vmem:[#allocation2 + $0xc0] sm:$0xff]
    %v1293 = vld [vmem:[#allocation2 + $0xc8] sm:$0xff]
    %v1294 = vld [vmem:[#allocation2 + $0xd0] sm:$0xff]
    %v1295 = vld [vmem:[#allocation2 + $0xd8] sm:$0xff]
    %v1296 = vld [vmem:[#allocation2 + $0xe0] sm:$0xff]
    %v1297 = vld [vmem:[#allocation2 + $0xe8] sm:$0xff]
    %v1298 = vld [vmem:[#allocation2 + $0xf0] sm:$0xff]
    %v1299 = vld [vmem:[#allocation2 + $0xf8] sm:$0xff]
    %v1300 = vpack.c.bf16 %v1291, %v1290
    %1301 = vmatprep.subr.bf16.mxu0 %v813
    %1302 = vmatpush1.bf16.msra.mxu0 %v812
    %1303 = vmatprep.subr.bf16.mxu0 %v809
    %1304 = vmatpush1.bf16.msra.mxu0 %v808
    %1305 = vmatprep.subr.bf16.mxu0 %v805
    %1306 = vmatpush1.bf16.msra.mxu0 %v804
    %1307 = vmatprep.subr.bf16.mxu0 %v801
    %1308 = vmatpush1.bf16.msra.mxu0 %v800
    %1309 = vmatprep.subr.bf16.mxu0 %v797
    %1310 = vmatpush1.bf16.msra.mxu0 %v796
    %1311 = vmatprep.subr.bf16.mxu0 %v793
    %1312 = vmatpush1.bf16.msra.mxu0 %v792
    %1313 = vmatprep.subr.bf16.mxu0 %v789
    %1314 = vmatpush1.bf16.msra.mxu0 %v788
    %1315 = vmatprep.subr.bf16.mxu0 %v785
    %1316 = vmatpush1.bf16.msra.mxu0 %v784
    %1317 = vmatprep.subr.bf16.mxu0 0
    %1318 = vmatpush2.bf16.msra.mxu0 0
    %1319 = vmatprep.subr.bf16.mxu0 0
    %1320 = vmatpush2.bf16.msra.mxu0 0
    %1321 = vmatprep.subr.bf16.mxu0 0
    %1322 = vmatpush2.bf16.msra.mxu0 0
    %1323 = vmatprep.subr.bf16.mxu0 0
    %1324 = vmatpush2.bf16.msra.mxu0 0
    %1325 = vmatprep.subr.bf16.mxu0 0
    %1326 = vmatpush2.bf16.msra.mxu0 0
    %1327 = vmatprep.subr.bf16.mxu0 0
    %1328 = vmatpush2.bf16.msra.mxu0 0
    %1329 = vmatprep.subr.bf16.mxu0 0
    %1330 = vmatpush2.bf16.msra.mxu0 0
    %1331 = vmatprep.subr.bf16.mxu0 0
    %1332 = vmatpush2.bf16.msra.mxu0 0
    %1333 = vmatprep.mubr.bf16.mxu0 0
    %1334 = vmatmul.mubr.bf16.gmra.mxu0 %v1300
    %v1335 = vpop.f32.mrf.mxu0
    %v1336 = vadd.f32 0.0, %v1335
    %v1337 = vpop.f32.mrf.mxu0
    %v1338 = vadd.f32 0.0, %v1337
    %v1339 = vpop.f32.mrf.mxu0
    %v1340 = vadd.f32 0.0, %v1339
    %v1341 = vpop.f32.mrf.mxu0
    %v1342 = vadd.f32 0.0, %v1341
    %1343 = vdwg.mxu0
    %1344 = vmatprep.subr.bf16.mxu0 %v815
    %1345 = vmatpush1.bf16.msra.mxu0 %v814
    %1346 = vmatprep.subr.bf16.mxu0 %v811
    %1347 = vmatpush1.bf16.msra.mxu0 %v810
    %1348 = vmatprep.subr.bf16.mxu0 %v807
    %1349 = vmatpush1.bf16.msra.mxu0 %v806
    %1350 = vmatprep.subr.bf16.mxu0 %v803
    %1351 = vmatpush1.bf16.msra.mxu0 %v802
    %1352 = vmatprep.subr.bf16.mxu0 %v799
    %1353 = vmatpush1.bf16.msra.mxu0 %v798
    %1354 = vmatprep.subr.bf16.mxu0 %v795
    %1355 = vmatpush1.bf16.msra.mxu0 %v794
    %1356 = vmatprep.subr.bf16.mxu0 %v791
    %1357 = vmatpush1.bf16.msra.mxu0 %v790
    %1358 = vmatprep.subr.bf16.mxu0 %v787
    %1359 = vmatpush1.bf16.msra.mxu0 %v786
    %1360 = vmatprep.subr.bf16.mxu0 0
    %1361 = vmatpush2.bf16.msra.mxu0 0
    %1362 = vmatprep.subr.bf16.mxu0 0
    %1363 = vmatpush2.bf16.msra.mxu0 0
    %1364 = vmatprep.subr.bf16.mxu0 0
    %1365 = vmatpush2.bf16.msra.mxu0 0
    %1366 = vmatprep.subr.bf16.mxu0 0
    %1367 = vmatpush2.bf16.msra.mxu0 0
    %1368 = vmatprep.subr.bf16.mxu0 0
    %1369 = vmatpush2.bf16.msra.mxu0 0
    %1370 = vmatprep.subr.bf16.mxu0 0
    %1371 = vmatpush2.bf16.msra.mxu0 0
    %1372 = vmatprep.subr.bf16.mxu0 0
    %1373 = vmatpush2.bf16.msra.mxu0 0
    %1374 = vmatprep.subr.bf16.mxu0 0
    %1375 = vmatpush2.bf16.msra.mxu0 0
    %1376 = vmatprep.mubr.bf16.mxu0 0
    %1377 = vmatmul.mubr.bf16.gmra.mxu0 %v1300
    %v1378 = vpop.f32.mrf.mxu0
    %v1379 = vadd.f32 0.0, %v1378
    %v1380 = vpop.f32.mrf.mxu0
    %v1381 = vadd.f32 0.0, %v1380
    %v1382 = vpop.f32.mrf.mxu0
    %v1383 = vadd.f32 0.0, %v1382
    %v1384 = vpop.f32.mrf.mxu0
    %v1385 = vadd.f32 0.0, %v1384
    %1386 = vdwg.mxu0
    %v1387 = vadd.f32 %v1292, %v1336
    %v1388 = vadd.f32 %v1293, %v1338
    %v1389 = vadd.f32 %v1294, %v1379
    %v1390 = vadd.f32 %v1295, %v1381
    %v1391 = vadd.f32 %v1296, %v1340
    %v1392 = vadd.f32 %v1297, %v1342
    %v1393 = vadd.f32 %v1298, %v1383
    %v1394 = vadd.f32 %v1299, %v1385
    %v1395 = vxor.u32 %v1387, 2147483648
    %v1396 = vxor.u32 %v1391, 2147483648
    %v1397 = vmul.f32 %v1395, 1.442695
    %v1398 = vpow.pop %v1397
    %v1399 = vmul.f32 %v1396, 1.442695
    %v1400 = vpow.pop %v1399
    %v1401 = vadd.f32 %v1398, 1.0
    %v1402 = vadd.f32 %v1400, 1.0
    %v1403 = vrcp.pop %v1401
    %v1404 = vmul.f32 1.0, %v1403
    %v1405 = vrcp.pop %v1402
    %v1406 = vmul.f32 1.0, %v1405
    %v1407 = vxor.u32 %v1388, 2147483648
    %v1408 = vxor.u32 %v1392, 2147483648
    %v1409 = vmul.f32 %v1407, 1.442695
    %v1410 = vpow.pop %v1409
    %v1411 = vmul.f32 %v1408, 1.442695
    %v1412 = vpow.pop %v1411
    %v1413 = vadd.f32 %v1410, 1.0
    %v1414 = vadd.f32 %v1412, 1.0
    %v1415 = vrcp.pop %v1413
    %v1416 = vmul.f32 1.0, %v1415
    %v1417 = vrcp.pop %v1414
    %v1418 = vmul.f32 1.0, %v1417
    %v1419 = vtanh.pop %v1389
    %v1420 = vtanh.pop %v1393
    %v1421 = vxor.u32 %v1390, 2147483648
    %v1422 = vxor.u32 %v1394, 2147483648
    %v1423 = vmul.f32 %v1421, 1.442695
    %v1424 = vpow.pop %v1423
    %v1425 = vmul.f32 %v1422, 1.442695
    %v1426 = vpow.pop %v1425
    %v1427 = vadd.f32 %v1424, 1.0
    %v1428 = vadd.f32 %v1426, 1.0
    %v1429 = vrcp.pop %v1427
    %v1430 = vmul.f32 1.0, %v1429
    %v1431 = vrcp.pop %v1428
    %v1432 = vmul.f32 1.0, %v1431
    %v1433 = vmul.f32 %v1416, %v1286
    %v1434 = vmul.f32 %v1418, %v1287
    %v1435 = vmul.f32 %v1404, %v1419
    %v1436 = vmul.f32 %v1406, %v1420
    %v1437 = vadd.f32 %v1433, %v1435
    %v1438 = vadd.f32 %v1434, %v1436
    %v1439 = vtanh.pop %v1437
    %v1440 = vtanh.pop %v1438
    %v1441 = vmul.f32 %v1430, %v1439
    %v1442 = vmul.f32 %v1432, %v1440
    %v1443 = vld [vmem:[#allocation2 + $0x100] sm:$0xff]
    %v1444 = vld [vmem:[#allocation2 + $0x108] sm:$0xff]
    %v1445 = vld [vmem:[#allocation2 + $0x110] sm:$0xff]
    %v1446 = vld [vmem:[#allocation2 + $0x118] sm:$0xff]
    %v1447 = vld [vmem:[#allocation2 + $0x120] sm:$0xff]
    %v1448 = vld [vmem:[#allocation2 + $0x128] sm:$0xff]
    %v1449 = vld [vmem:[#allocation2 + $0x130] sm:$0xff]
    %v1450 = vld [vmem:[#allocation2 + $0x138] sm:$0xff]
    %v1451 = vpack.c.bf16 %v1442, %v1441
    %1452 = vmatprep.subr.bf16.mxu0 %v813
    %1453 = vmatpush1.bf16.msra.mxu0 %v812
    %1454 = vmatprep.subr.bf16.mxu0 %v809
    %1455 = vmatpush1.bf16.msra.mxu0 %v808
    %1456 = vmatprep.subr.bf16.mxu0 %v805
    %1457 = vmatpush1.bf16.msra.mxu0 %v804
    %1458 = vmatprep.subr.bf16.mxu0 %v801
    %1459 = vmatpush1.bf16.msra.mxu0 %v800
    %1460 = vmatprep.subr.bf16.mxu0 %v797
    %1461 = vmatpush1.bf16.msra.mxu0 %v796
    %1462 = vmatprep.subr.bf16.mxu0 %v793
    %1463 = vmatpush1.bf16.msra.mxu0 %v792
    %1464 = vmatprep.subr.bf16.mxu0 %v789
    %1465 = vmatpush1.bf16.msra.mxu0 %v788
    %1466 = vmatprep.subr.bf16.mxu0 %v785
    %1467 = vmatpush1.bf16.msra.mxu0 %v784
    %1468 = vmatprep.subr.bf16.mxu0 0
    %1469 = vmatpush2.bf16.msra.mxu0 0
    %1470 = vmatprep.subr.bf16.mxu0 0
    %1471 = vmatpush2.bf16.msra.mxu0 0
    %1472 = vmatprep.subr.bf16.mxu0 0
    %1473 = vmatpush2.bf16.msra.mxu0 0
    %1474 = vmatprep.subr.bf16.mxu0 0
    %1475 = vmatpush2.bf16.msra.mxu0 0
    %1476 = vmatprep.subr.bf16.mxu0 0
    %1477 = vmatpush2.bf16.msra.mxu0 0
    %1478 = vmatprep.subr.bf16.mxu0 0
    %1479 = vmatpush2.bf16.msra.mxu0 0
    %1480 = vmatprep.subr.bf16.mxu0 0
    %1481 = vmatpush2.bf16.msra.mxu0 0
    %1482 = vmatprep.subr.bf16.mxu0 0
    %1483 = vmatpush2.bf16.msra.mxu0 0
    %1484 = vmatprep.mubr.bf16.mxu0 0
    %1485 = vmatmul.mubr.bf16.gmra.mxu0 %v1451
    %v1486 = vpop.f32.mrf.mxu0
    %v1487 = vadd.f32 0.0, %v1486
    %v1488 = vpop.f32.mrf.mxu0
    %v1489 = vadd.f32 0.0, %v1488
    %v1490 = vpop.f32.mrf.mxu0
    %v1491 = vadd.f32 0.0, %v1490
    %v1492 = vpop.f32.mrf.mxu0
    %v1493 = vadd.f32 0.0, %v1492
    %1494 = vdwg.mxu0
    %1495 = vmatprep.subr.bf16.mxu0 %v815
    %1496 = vmatpush1.bf16.msra.mxu0 %v814
    %1497 = vmatprep.subr.bf16.mxu0 %v811
    %1498 = vmatpush1.bf16.msra.mxu0 %v810
    %1499 = vmatprep.subr.bf16.mxu0 %v807
    %1500 = vmatpush1.bf16.msra.mxu0 %v806
    %1501 = vmatprep.subr.bf16.mxu0 %v803
    %1502 = vmatpush1.bf16.msra.mxu0 %v802
    %1503 = vmatprep.subr.bf16.mxu0 %v799
    %1504 = vmatpush1.bf16.msra.mxu0 %v798
    %1505 = vmatprep.subr.bf16.mxu0 %v795
    %1506 = vmatpush1.bf16.msra.mxu0 %v794
    %1507 = vmatprep.subr.bf16.mxu0 %v791
    %1508 = vmatpush1.bf16.msra.mxu0 %v790
    %1509 = vmatprep.subr.bf16.mxu0 %v787
    %1510 = vmatpush1.bf16.msra.mxu0 %v786
    %1511 = vmatprep.subr.bf16.mxu0 0
    %1512 = vmatpush2.bf16.msra.mxu0 0
    %1513 = vmatprep.subr.bf16.mxu0 0
    %1514 = vmatpush2.bf16.msra.mxu0 0
    %1515 = vmatprep.subr.bf16.mxu0 0
    %1516 = vmatpush2.bf16.msra.mxu0 0
    %1517 = vmatprep.subr.bf16.mxu0 0
    %1518 = vmatpush2.bf16.msra.mxu0 0
    %1519 = vmatprep.subr.bf16.mxu0 0
    %1520 = vmatpush2.bf16.msra.mxu0 0
    %1521 = vmatprep.subr.bf16.mxu0 0
    %1522 = vmatpush2.bf16.msra.mxu0 0
    %1523 = vmatprep.subr.bf16.mxu0 0
    %1524 = vmatpush2.bf16.msra.mxu0 0
    %1525 = vmatprep.subr.bf16.mxu0 0
    %1526 = vmatpush2.bf16.msra.mxu0 0
    %1527 = vmatprep.mubr.bf16.mxu0 0
    %1528 = vmatmul.mubr.bf16.gmra.mxu0 %v1451
    %v1529 = vpop.f32.mrf.mxu0
    %v1530 = vadd.f32 0.0, %v1529
    %v1531 = vpop.f32.mrf.mxu0
    %v1532 = vadd.f32 0.0, %v1531
    %v1533 = vpop.f32.mrf.mxu0
    %v1534 = vadd.f32 0.0, %v1533
    %v1535 = vpop.f32.mrf.mxu0
    %v1536 = vadd.f32 0.0, %v1535
    %1537 = vdwg.mxu0
    %v1538 = vadd.f32 %v1443, %v1487
    %v1539 = vadd.f32 %v1444, %v1489
    %v1540 = vadd.f32 %v1445, %v1530
    %v1541 = vadd.f32 %v1446, %v1532
    %v1542 = vadd.f32 %v1447, %v1491
    %v1543 = vadd.f32 %v1448, %v1493
    %v1544 = vadd.f32 %v1449, %v1534
    %v1545 = vadd.f32 %v1450, %v1536
    %v1546 = vxor.u32 %v1538, 2147483648
    %v1547 = vxor.u32 %v1542, 2147483648
    %v1548 = vmul.f32 %v1546, 1.442695
    %v1549 = vpow.pop %v1548
    %v1550 = vmul.f32 %v1547, 1.442695
    %v1551 = vpow.pop %v1550
    %v1552 = vadd.f32 %v1549, 1.0
    %v1553 = vadd.f32 %v1551, 1.0
    %v1554 = vrcp.pop %v1552
    %v1555 = vmul.f32 1.0, %v1554
    %v1556 = vrcp.pop %v1553
    %v1557 = vmul.f32 1.0, %v1556
    %v1558 = vxor.u32 %v1539, 2147483648
    %v1559 = vxor.u32 %v1543, 2147483648
    %v1560 = vmul.f32 %v1558, 1.442695
    %v1561 = vpow.pop %v1560
    %v1562 = vmul.f32 %v1559, 1.442695
    %v1563 = vpow.pop %v1562
    %v1564 = vadd.f32 %v1561, 1.0
    %v1565 = vadd.f32 %v1563, 1.0
    %v1566 = vrcp.pop %v1564
    %v1567 = vmul.f32 1.0, %v1566
    %v1568 = vrcp.pop %v1565
    %v1569 = vmul.f32 1.0, %v1568
    %v1570 = vtanh.pop %v1540
    %v1571 = vtanh.pop %v1544
    %v1572 = vxor.u32 %v1541, 2147483648
    %v1573 = vxor.u32 %v1545, 2147483648
    %v1574 = vmul.f32 %v1572, 1.442695
    %v1575 = vpow.pop %v1574
    %v1576 = vmul.f32 %v1573, 1.442695
    %v1577 = vpow.pop %v1576
    %v1578 = vadd.f32 %v1575, 1.0
    %v1579 = vadd.f32 %v1577, 1.0
    %v1580 = vrcp.pop %v1578
    %v1581 = vmul.f32 1.0, %v1580
    %v1582 = vrcp.pop %v1579
    %v1583 = vmul.f32 1.0, %v1582
    %v1584 = vmul.f32 %v1567, %v1437
    %v1585 = vmul.f32 %v1569, %v1438
    %v1586 = vmul.f32 %v1555, %v1570
    %v1587 = vmul.f32 %v1557, %v1571
    %v1588 = vadd.f32 %v1584, %v1586
    %v1589 = vadd.f32 %v1585, %v1587
    %v1590 = vtanh.pop %v1588
    %v1591 = vtanh.pop %v1589
    %v1592 = vmul.f32 %v1581, %v1590
    %v1593 = vmul.f32 %v1583, %v1591
    %v1594 = vld [vmem:[#allocation2 + $0x140] sm:$0xff]
    %v1595 = vld [vmem:[#allocation2 + $0x148] sm:$0xff]
    %v1596 = vld [vmem:[#allocation2 + $0x150] sm:$0xff]
    %v1597 = vld [vmem:[#allocation2 + $0x158] sm:$0xff]
    %v1598 = vld [vmem:[#allocation2 + $0x160] sm:$0xff]
    %v1599 = vld [vmem:[#allocation2 + $0x168] sm:$0xff]
    %v1600 = vld [vmem:[#allocation2 + $0x170] sm:$0xff]
    %v1601 = vld [vmem:[#allocation2 + $0x178] sm:$0xff]
    %v1602 = vpack.c.bf16 %v1593, %v1592
    %1603 = vmatprep.subr.bf16.mxu0 %v813
    %1604 = vmatpush1.bf16.msra.mxu0 %v812
    %1605 = vmatprep.subr.bf16.mxu0 %v809
    %1606 = vmatpush1.bf16.msra.mxu0 %v808
    %1607 = vmatprep.subr.bf16.mxu0 %v805
    %1608 = vmatpush1.bf16.msra.mxu0 %v804
    %1609 = vmatprep.subr.bf16.mxu0 %v801
    %1610 = vmatpush1.bf16.msra.mxu0 %v800
    %1611 = vmatprep.subr.bf16.mxu0 %v797
    %1612 = vmatpush1.bf16.msra.mxu0 %v796
    %1613 = vmatprep.subr.bf16.mxu0 %v793
    %1614 = vmatpush1.bf16.msra.mxu0 %v792
    %1615 = vmatprep.subr.bf16.mxu0 %v789
    %1616 = vmatpush1.bf16.msra.mxu0 %v788
    %1617 = vmatprep.subr.bf16.mxu0 %v785
    %1618 = vmatpush1.bf16.msra.mxu0 %v784
    %1619 = vmatprep.subr.bf16.mxu0 0
    %1620 = vmatpush2.bf16.msra.mxu0 0
    %1621 = vmatprep.subr.bf16.mxu0 0
    %1622 = vmatpush2.bf16.msra.mxu0 0
    %1623 = vmatprep.subr.bf16.mxu0 0
    %1624 = vmatpush2.bf16.msra.mxu0 0
    %1625 = vmatprep.subr.bf16.mxu0 0
    %1626 = vmatpush2.bf16.msra.mxu0 0
    %1627 = vmatprep.subr.bf16.mxu0 0
    %1628 = vmatpush2.bf16.msra.mxu0 0
    %1629 = vmatprep.subr.bf16.mxu0 0
    %1630 = vmatpush2.bf16.msra.mxu0 0
    %1631 = vmatprep.subr.bf16.mxu0 0
    %1632 = vmatpush2.bf16.msra.mxu0 0
    %1633 = vmatprep.subr.bf16.mxu0 0
    %1634 = vmatpush2.bf16.msra.mxu0 0
    %1635 = vmatprep.mubr.bf16.mxu0 0
    %1636 = vmatmul.mubr.bf16.gmra.mxu0 %v1602
    %v1637 = vpop.f32.mrf.mxu0
    %v1638 = vadd.f32 0.0, %v1637
    %v1639 = vpop.f32.mrf.mxu0
    %v1640 = vadd.f32 0.0, %v1639
    %v1641 = vpop.f32.mrf.mxu0
    %v1642 = vadd.f32 0.0, %v1641
    %v1643 = vpop.f32.mrf.mxu0
    %v1644 = vadd.f32 0.0, %v1643
    %1645 = vdwg.mxu0
    %1646 = vmatprep.subr.bf16.mxu0 %v815
    %1647 = vmatpush1.bf16.msra.mxu0 %v814
    %1648 = vmatprep.subr.bf16.mxu0 %v811
    %1649 = vmatpush1.bf16.msra.mxu0 %v810
    %1650 = vmatprep.subr.bf16.mxu0 %v807
    %1651 = vmatpush1.bf16.msra.mxu0 %v806
    %1652 = vmatprep.subr.bf16.mxu0 %v803
    %1653 = vmatpush1.bf16.msra.mxu0 %v802
    %1654 = vmatprep.subr.bf16.mxu0 %v799
    %1655 = vmatpush1.bf16.msra.mxu0 %v798
    %1656 = vmatprep.subr.bf16.mxu0 %v795
    %1657 = vmatpush1.bf16.msra.mxu0 %v794
    %1658 = vmatprep.subr.bf16.mxu0 %v791
    %1659 = vmatpush1.bf16.msra.mxu0 %v790
    %1660 = vmatprep.subr.bf16.mxu0 %v787
    %1661 = vmatpush1.bf16.msra.mxu0 %v786
    %1662 = vmatprep.subr.bf16.mxu0 0
    %1663 = vmatpush2.bf16.msra.mxu0 0
    %1664 = vmatprep.subr.bf16.mxu0 0
    %1665 = vmatpush2.bf16.msra.mxu0 0
    %1666 = vmatprep.subr.bf16.mxu0 0
    %1667 = vmatpush2.bf16.msra.mxu0 0
    %1668 = vmatprep.subr.bf16.mxu0 0
    %1669 = vmatpush2.bf16.msra.mxu0 0
    %1670 = vmatprep.subr.bf16.mxu0 0
    %1671 = vmatpush2.bf16.msra.mxu0 0
    %1672 = vmatprep.subr.bf16.mxu0 0
    %1673 = vmatpush2.bf16.msra.mxu0 0
    %1674 = vmatprep.subr.bf16.mxu0 0
    %1675 = vmatpush2.bf16.msra.mxu0 0
    %1676 = vmatprep.subr.bf16.mxu0 0
    %1677 = vmatpush2.bf16.msra.mxu0 0
    %1678 = vmatprep.mubr.bf16.mxu0 0
    %1679 = vmatmul.mubr.bf16.gmra.mxu0 %v1602
    %v1680 = vpop.f32.mrf.mxu0
    %v1681 = vadd.f32 0.0, %v1680
    %v1682 = vpop.f32.mrf.mxu0
    %v1683 = vadd.f32 0.0, %v1682
    %v1684 = vpop.f32.mrf.mxu0
    %v1685 = vadd.f32 0.0, %v1684
    %v1686 = vpop.f32.mrf.mxu0
    %v1687 = vadd.f32 0.0, %v1686
    %1688 = vdwg.mxu0
    %v1689 = vadd.f32 %v1594, %v1638
    %v1690 = vadd.f32 %v1595, %v1640
    %v1691 = vadd.f32 %v1596, %v1681
    %v1692 = vadd.f32 %v1597, %v1683
    %v1693 = vadd.f32 %v1598, %v1642
    %v1694 = vadd.f32 %v1599, %v1644
    %v1695 = vadd.f32 %v1600, %v1685
    %v1696 = vadd.f32 %v1601, %v1687
    %v1697 = vxor.u32 %v1689, 2147483648
    %v1698 = vxor.u32 %v1693, 2147483648
    %v1699 = vmul.f32 %v1697, 1.442695
    %v1700 = vpow.pop %v1699
    %v1701 = vmul.f32 %v1698, 1.442695
    %v1702 = vpow.pop %v1701
    %v1703 = vadd.f32 %v1700, 1.0
    %v1704 = vadd.f32 %v1702, 1.0
    %v1705 = vrcp.pop %v1703
    %v1706 = vmul.f32 1.0, %v1705
    %v1707 = vrcp.pop %v1704
    %v1708 = vmul.f32 1.0, %v1707
    %v1709 = vxor.u32 %v1690, 2147483648
    %v1710 = vxor.u32 %v1694, 2147483648
    %v1711 = vmul.f32 %v1709, 1.442695
    %v1712 = vpow.pop %v1711
    %v1713 = vmul.f32 %v1710, 1.442695
    %v1714 = vpow.pop %v1713
    %v1715 = vadd.f32 %v1712, 1.0
    %v1716 = vadd.f32 %v1714, 1.0
    %v1717 = vrcp.pop %v1715
    %v1718 = vmul.f32 1.0, %v1717
    %v1719 = vrcp.pop %v1716
    %v1720 = vmul.f32 1.0, %v1719
    %v1721 = vtanh.pop %v1691
    %v1722 = vtanh.pop %v1695
    %v1723 = vxor.u32 %v1692, 2147483648
    %v1724 = vxor.u32 %v1696, 2147483648
    %v1725 = vmul.f32 %v1723, 1.442695
    %v1726 = vpow.pop %v1725
    %v1727 = vmul.f32 %v1724, 1.442695
    %v1728 = vpow.pop %v1727
    %v1729 = vadd.f32 %v1726, 1.0
    %v1730 = vadd.f32 %v1728, 1.0
    %v1731 = vrcp.pop %v1729
    %v1732 = vmul.f32 1.0, %v1731
    %v1733 = vrcp.pop %v1730
    %v1734 = vmul.f32 1.0, %v1733
    %v1735 = vmul.f32 %v1718, %v1588
    %v1736 = vmul.f32 %v1720, %v1589
    %v1737 = vmul.f32 %v1706, %v1721
    %v1738 = vmul.f32 %v1708, %v1722
    %v1739 = vadd.f32 %v1735, %v1737
    %v1740 = vadd.f32 %v1736, %v1738
    %v1741 = vtanh.pop %v1739
    %v1742 = vtanh.pop %v1740
    %v1743 = vmul.f32 %v1732, %v1741
    %v1744 = vmul.f32 %v1734, %v1742
    %v1745 = vld [vmem:[#allocation2 + $0x180] sm:$0xff]
    %v1746 = vld [vmem:[#allocation2 + $0x188] sm:$0xff]
    %v1747 = vld [vmem:[#allocation2 + $0x190] sm:$0xff]
    %v1748 = vld [vmem:[#allocation2 + $0x198] sm:$0xff]
    %v1749 = vld [vmem:[#allocation2 + $0x1a0] sm:$0xff]
    %v1750 = vld [vmem:[#allocation2 + $0x1a8] sm:$0xff]
    %v1751 = vld [vmem:[#allocation2 + $0x1b0] sm:$0xff]
    %v1752 = vld [vmem:[#allocation2 + $0x1b8] sm:$0xff]
    %v1753 = vpack.c.bf16 %v1744, %v1743
    %1754 = vmatprep.subr.bf16.mxu0 %v813
    %1755 = vmatpush1.bf16.msra.mxu0 %v812
    %1756 = vmatprep.subr.bf16.mxu0 %v809
    %1757 = vmatpush1.bf16.msra.mxu0 %v808
    %1758 = vmatprep.subr.bf16.mxu0 %v805
    %1759 = vmatpush1.bf16.msra.mxu0 %v804
    %1760 = vmatprep.subr.bf16.mxu0 %v801
    %1761 = vmatpush1.bf16.msra.mxu0 %v800
    %1762 = vmatprep.subr.bf16.mxu0 %v797
    %1763 = vmatpush1.bf16.msra.mxu0 %v796
    %1764 = vmatprep.subr.bf16.mxu0 %v793
    %1765 = vmatpush1.bf16.msra.mxu0 %v792
    %1766 = vmatprep.subr.bf16.mxu0 %v789
    %1767 = vmatpush1.bf16.msra.mxu0 %v788
    %1768 = vmatprep.subr.bf16.mxu0 %v785
    %1769 = vmatpush1.bf16.msra.mxu0 %v784
    %1770 = vmatprep.subr.bf16.mxu0 0
    %1771 = vmatpush2.bf16.msra.mxu0 0
    %1772 = vmatprep.subr.bf16.mxu0 0
    %1773 = vmatpush2.bf16.msra.mxu0 0
    %1774 = vmatprep.subr.bf16.mxu0 0
    %1775 = vmatpush2.bf16.msra.mxu0 0
    %1776 = vmatprep.subr.bf16.mxu0 0
    %1777 = vmatpush2.bf16.msra.mxu0 0
    %1778 = vmatprep.subr.bf16.mxu0 0
    %1779 = vmatpush2.bf16.msra.mxu0 0
    %1780 = vmatprep.subr.bf16.mxu0 0
    %1781 = vmatpush2.bf16.msra.mxu0 0
    %1782 = vmatprep.subr.bf16.mxu0 0
    %1783 = vmatpush2.bf16.msra.mxu0 0
    %1784 = vmatprep.subr.bf16.mxu0 0
    %1785 = vmatpush2.bf16.msra.mxu0 0
    %1786 = vmatprep.mubr.bf16.mxu0 0
    %1787 = vmatmul.mubr.bf16.gmra.mxu0 %v1753
    %v1788 = vpop.f32.mrf.mxu0
    %v1789 = vadd.f32 0.0, %v1788
    %v1790 = vpop.f32.mrf.mxu0
    %v1791 = vadd.f32 0.0, %v1790
    %v1792 = vpop.f32.mrf.mxu0
    %v1793 = vadd.f32 0.0, %v1792
    %v1794 = vpop.f32.mrf.mxu0
    %v1795 = vadd.f32 0.0, %v1794
    %1796 = vdwg.mxu0
    %1797 = vmatprep.subr.bf16.mxu0 %v815
    %1798 = vmatpush1.bf16.msra.mxu0 %v814
    %1799 = vmatprep.subr.bf16.mxu0 %v811
    %1800 = vmatpush1.bf16.msra.mxu0 %v810
    %1801 = vmatprep.subr.bf16.mxu0 %v807
    %1802 = vmatpush1.bf16.msra.mxu0 %v806
    %1803 = vmatprep.subr.bf16.mxu0 %v803
    %1804 = vmatpush1.bf16.msra.mxu0 %v802
    %1805 = vmatprep.subr.bf16.mxu0 %v799
    %1806 = vmatpush1.bf16.msra.mxu0 %v798
    %1807 = vmatprep.subr.bf16.mxu0 %v795
    %1808 = vmatpush1.bf16.msra.mxu0 %v794
    %1809 = vmatprep.subr.bf16.mxu0 %v791
    %1810 = vmatpush1.bf16.msra.mxu0 %v790
    %1811 = vmatprep.subr.bf16.mxu0 %v787
    %1812 = vmatpush1.bf16.msra.mxu0 %v786
    %1813 = vmatprep.subr.bf16.mxu0 0
    %1814 = vmatpush2.bf16.msra.mxu0 0
    %1815 = vmatprep.subr.bf16.mxu0 0
    %1816 = vmatpush2.bf16.msra.mxu0 0
    %1817 = vmatprep.subr.bf16.mxu0 0
    %1818 = vmatpush2.bf16.msra.mxu0 0
    %1819 = vmatprep.subr.bf16.mxu0 0
    %1820 = vmatpush2.bf16.msra.mxu0 0
    %1821 = vmatprep.subr.bf16.mxu0 0
    %1822 = vmatpush2.bf16.msra.mxu0 0
    %1823 = vmatprep.subr.bf16.mxu0 0
    %1824 = vmatpush2.bf16.msra.mxu0 0
    %1825 = vmatprep.subr.bf16.mxu0 0
    %1826 = vmatpush2.bf16.msra.mxu0 0
    %1827 = vmatprep.subr.bf16.mxu0 0
    %1828 = vmatpush2.bf16.msra.mxu0 0
    %1829 = vmatprep.mubr.bf16.mxu0 0
    %1830 = vmatmul.mubr.bf16.gmra.mxu0 %v1753
    %v1831 = vpop.f32.mrf.mxu0
    %v1832 = vadd.f32 0.0, %v1831
    %v1833 = vpop.f32.mrf.mxu0
    %v1834 = vadd.f32 0.0, %v1833
    %v1835 = vpop.f32.mrf.mxu0
    %v1836 = vadd.f32 0.0, %v1835
    %v1837 = vpop.f32.mrf.mxu0
    %v1838 = vadd.f32 0.0, %v1837
    %1839 = vdwg.mxu0
    %v1840 = vadd.f32 %v1745, %v1789
    %v1841 = vadd.f32 %v1746, %v1791
    %v1842 = vadd.f32 %v1747, %v1832
    %v1843 = vadd.f32 %v1748, %v1834
    %v1844 = vadd.f32 %v1749, %v1793
    %v1845 = vadd.f32 %v1750, %v1795
    %v1846 = vadd.f32 %v1751, %v1836
    %v1847 = vadd.f32 %v1752, %v1838
    %v1848 = vxor.u32 %v1840, 2147483648
    %v1849 = vxor.u32 %v1844, 2147483648
    %v1850 = vmul.f32 %v1848, 1.442695
    %v1851 = vpow.pop %v1850
    %v1852 = vmul.f32 %v1849, 1.442695
    %v1853 = vpow.pop %v1852
    %v1854 = vadd.f32 %v1851, 1.0
    %v1855 = vadd.f32 %v1853, 1.0
    %v1856 = vrcp.pop %v1854
    %v1857 = vmul.f32 1.0, %v1856
    %v1858 = vrcp.pop %v1855
    %v1859 = vmul.f32 1.0, %v1858
    %v1860 = vxor.u32 %v1841, 2147483648
    %v1861 = vxor.u32 %v1845, 2147483648
    %v1862 = vmul.f32 %v1860, 1.442695
    %v1863 = vpow.pop %v1862
    %v1864 = vmul.f32 %v1861, 1.442695
    %v1865 = vpow.pop %v1864
    %v1866 = vadd.f32 %v1863, 1.0
    %v1867 = vadd.f32 %v1865, 1.0
    %v1868 = vrcp.pop %v1866
    %v1869 = vmul.f32 1.0, %v1868
    %v1870 = vrcp.pop %v1867
    %v1871 = vmul.f32 1.0, %v1870
    %v1872 = vtanh.pop %v1842
    %v1873 = vtanh.pop %v1846
    %v1874 = vxor.u32 %v1843, 2147483648
    %v1875 = vxor.u32 %v1847, 2147483648
    %v1876 = vmul.f32 %v1874, 1.442695
    %v1877 = vpow.pop %v1876
    %v1878 = vmul.f32 %v1875, 1.442695
    %v1879 = vpow.pop %v1878
    %v1880 = vadd.f32 %v1877, 1.0
    %v1881 = vadd.f32 %v1879, 1.0
    %v1882 = vrcp.pop %v1880
    %v1883 = vmul.f32 1.0, %v1882
    %v1884 = vrcp.pop %v1881
    %v1885 = vmul.f32 1.0, %v1884
    %v1886 = vmul.f32 %v1869, %v1739
    %v1887 = vmul.f32 %v1871, %v1740
    %v1888 = vmul.f32 %v1857, %v1872
    %v1889 = vmul.f32 %v1859, %v1873
    %v1890 = vadd.f32 %v1886, %v1888
    %v1891 = vadd.f32 %v1887, %v1889
    %v1892 = vtanh.pop %v1890
    %v1893 = vtanh.pop %v1891
    %v1894 = vmul.f32 %v1883, %v1892
    %v1895 = vmul.f32 %v1885, %v1893
    %v1896 = vld [vmem:[#allocation2 + $0x1c0] sm:$0xff]
    %v1897 = vld [vmem:[#allocation2 + $0x1c8] sm:$0xff]
    %v1898 = vld [vmem:[#allocation2 + $0x1d0] sm:$0xff]
    %v1899 = vld [vmem:[#allocation2 + $0x1d8] sm:$0xff]
    %v1900 = vld [vmem:[#allocation2 + $0x1e0] sm:$0xff]
    %v1901 = vld [vmem:[#allocation2 + $0x1e8] sm:$0xff]
    %v1902 = vld [vmem:[#allocation2 + $0x1f0] sm:$0xff]
    %v1903 = vld [vmem:[#allocation2 + $0x1f8] sm:$0xff]
    %v1904 = vpack.c.bf16 %v1895, %v1894
    %1905 = vmatprep.subr.bf16.mxu0 %v813
    %1906 = vmatpush1.bf16.msra.mxu0 %v812
    %1907 = vmatprep.subr.bf16.mxu0 %v809
    %1908 = vmatpush1.bf16.msra.mxu0 %v808
    %1909 = vmatprep.subr.bf16.mxu0 %v805
    %1910 = vmatpush1.bf16.msra.mxu0 %v804
    %1911 = vmatprep.subr.bf16.mxu0 %v801
    %1912 = vmatpush1.bf16.msra.mxu0 %v800
    %1913 = vmatprep.subr.bf16.mxu0 %v797
    %1914 = vmatpush1.bf16.msra.mxu0 %v796
    %1915 = vmatprep.subr.bf16.mxu0 %v793
    %1916 = vmatpush1.bf16.msra.mxu0 %v792
    %1917 = vmatprep.subr.bf16.mxu0 %v789
    %1918 = vmatpush1.bf16.msra.mxu0 %v788
    %1919 = vmatprep.subr.bf16.mxu0 %v785
    %1920 = vmatpush1.bf16.msra.mxu0 %v784
    %1921 = vmatprep.subr.bf16.mxu0 0
    %1922 = vmatpush2.bf16.msra.mxu0 0
    %1923 = vmatprep.subr.bf16.mxu0 0
    %1924 = vmatpush2.bf16.msra.mxu0 0
    %1925 = vmatprep.subr.bf16.mxu0 0
    %1926 = vmatpush2.bf16.msra.mxu0 0
    %1927 = vmatprep.subr.bf16.mxu0 0
    %1928 = vmatpush2.bf16.msra.mxu0 0
    %1929 = vmatprep.subr.bf16.mxu0 0
    %1930 = vmatpush2.bf16.msra.mxu0 0
    %1931 = vmatprep.subr.bf16.mxu0 0
    %1932 = vmatpush2.bf16.msra.mxu0 0
    %1933 = vmatprep.subr.bf16.mxu0 0
    %1934 = vmatpush2.bf16.msra.mxu0 0
    %1935 = vmatprep.subr.bf16.mxu0 0
    %1936 = vmatpush2.bf16.msra.mxu0 0
    %1937 = vmatprep.mubr.bf16.mxu0 0
    %1938 = vmatmul.mubr.bf16.gmra.mxu0 %v1904
    %v1939 = vpop.f32.mrf.mxu0
    %v1940 = vadd.f32 0.0, %v1939
    %v1941 = vpop.f32.mrf.mxu0
    %v1942 = vadd.f32 0.0, %v1941
    %v1943 = vpop.f32.mrf.mxu0
    %v1944 = vadd.f32 0.0, %v1943
    %v1945 = vpop.f32.mrf.mxu0
    %v1946 = vadd.f32 0.0, %v1945
    %1947 = vdwg.mxu0
    %1948 = vmatprep.subr.bf16.mxu0 %v815
    %1949 = vmatpush1.bf16.msra.mxu0 %v814
    %1950 = vmatprep.subr.bf16.mxu0 %v811
    %1951 = vmatpush1.bf16.msra.mxu0 %v810
    %1952 = vmatprep.subr.bf16.mxu0 %v807
    %1953 = vmatpush1.bf16.msra.mxu0 %v806
    %1954 = vmatprep.subr.bf16.mxu0 %v803
    %1955 = vmatpush1.bf16.msra.mxu0 %v802
    %1956 = vmatprep.subr.bf16.mxu0 %v799
    %1957 = vmatpush1.bf16.msra.mxu0 %v798
    %1958 = vmatprep.subr.bf16.mxu0 %v795
    %1959 = vmatpush1.bf16.msra.mxu0 %v794
    %1960 = vmatprep.subr.bf16.mxu0 %v791
    %1961 = vmatpush1.bf16.msra.mxu0 %v790
    %1962 = vmatprep.subr.bf16.mxu0 %v787
    %1963 = vmatpush1.bf16.msra.mxu0 %v786
    %1964 = vmatprep.subr.bf16.mxu0 0
    %1965 = vmatpush2.bf16.msra.mxu0 0
    %1966 = vmatprep.subr.bf16.mxu0 0
    %1967 = vmatpush2.bf16.msra.mxu0 0
    %1968 = vmatprep.subr.bf16.mxu0 0
    %1969 = vmatpush2.bf16.msra.mxu0 0
    %1970 = vmatprep.subr.bf16.mxu0 0
    %1971 = vmatpush2.bf16.msra.mxu0 0
    %1972 = vmatprep.subr.bf16.mxu0 0
    %1973 = vmatpush2.bf16.msra.mxu0 0
    %1974 = vmatprep.subr.bf16.mxu0 0
    %1975 = vmatpush2.bf16.msra.mxu0 0
    %1976 = vmatprep.subr.bf16.mxu0 0
    %1977 = vmatpush2.bf16.msra.mxu0 0
    %1978 = vmatprep.subr.bf16.mxu0 0
    %1979 = vmatpush2.bf16.msra.mxu0 0
    %1980 = vmatprep.mubr.bf16.mxu0 0
    %1981 = vmatmul.mubr.bf16.gmra.mxu0 %v1904
    %v1982 = vpop.f32.mrf.mxu0
    %v1983 = vadd.f32 0.0, %v1982
    %v1984 = vpop.f32.mrf.mxu0
    %v1985 = vadd.f32 0.0, %v1984
    %v1986 = vpop.f32.mrf.mxu0
    %v1987 = vadd.f32 0.0, %v1986
    %v1988 = vpop.f32.mrf.mxu0
    %v1989 = vadd.f32 0.0, %v1988
    %1990 = vdwg.mxu0
    %v1991 = vadd.f32 %v1896, %v1940
    %v1992 = vadd.f32 %v1897, %v1942
    %v1993 = vadd.f32 %v1898, %v1983
    %v1994 = vadd.f32 %v1899, %v1985
    %v1995 = vadd.f32 %v1900, %v1944
    %v1996 = vadd.f32 %v1901, %v1946
    %v1997 = vadd.f32 %v1902, %v1987
    %v1998 = vadd.f32 %v1903, %v1989
    %v1999 = vxor.u32 %v1991, 2147483648
    %v2000 = vxor.u32 %v1995, 2147483648
    %v2001 = vmul.f32 %v1999, 1.442695
    %v2002 = vpow.pop %v2001
    %v2003 = vmul.f32 %v2000, 1.442695
    %v2004 = vpow.pop %v2003
    %v2005 = vadd.f32 %v2002, 1.0
    %v2006 = vadd.f32 %v2004, 1.0
    %v2007 = vrcp.pop %v2005
    %v2008 = vmul.f32 1.0, %v2007
    %v2009 = vrcp.pop %v2006
    %v2010 = vmul.f32 1.0, %v2009
    %v2011 = vxor.u32 %v1992, 2147483648
    %v2012 = vxor.u32 %v1996, 2147483648
    %v2013 = vmul.f32 %v2011, 1.442695
    %v2014 = vpow.pop %v2013
    %v2015 = vmul.f32 %v2012, 1.442695
    %v2016 = vpow.pop %v2015
    %v2017 = vadd.f32 %v2014, 1.0
    %v2018 = vadd.f32 %v2016, 1.0
    %v2019 = vrcp.pop %v2017
    %v2020 = vmul.f32 1.0, %v2019
    %v2021 = vrcp.pop %v2018
    %v2022 = vmul.f32 1.0, %v2021
    %v2023 = vtanh.pop %v1993
    %v2024 = vtanh.pop %v1997
    %v2025 = vxor.u32 %v1994, 2147483648
    %v2026 = vxor.u32 %v1998, 2147483648
    %v2027 = vmul.f32 %v2025, 1.442695
    %v2028 = vpow.pop %v2027
    %v2029 = vmul.f32 %v2026, 1.442695
    %v2030 = vpow.pop %v2029
    %v2031 = vadd.f32 %v2028, 1.0
    %v2032 = vadd.f32 %v2030, 1.0
    %v2033 = vrcp.pop %v2031
    %v2034 = vmul.f32 1.0, %v2033
    %v2035 = vrcp.pop %v2032
    %v2036 = vmul.f32 1.0, %v2035
    %v2037 = vmul.f32 %v2020, %v1890
    %v2038 = vmul.f32 %v2022, %v1891
    %v2039 = vmul.f32 %v2008, %v2023
    %v2040 = vmul.f32 %v2010, %v2024
    %v2041 = vadd.f32 %v2037, %v2039
    %v2042 = vadd.f32 %v2038, %v2040
    %v2043 = vtanh.pop %v2041
    %v2044 = vtanh.pop %v2042
    %v2045 = vmul.f32 %v2034, %v2043
    %v2046 = vmul.f32 %v2036, %v2044
    %v2047 = vpack.c.bf16 %v2046, %v2045
    %v2048 = vld [vmem:[#allocation9] sm:$0xf]
    %v2049 = vld [vmem:[#allocation9 + $0x4] sm:$0xf]
    %v2050 = vld [vmem:[#allocation9 + $0x8] sm:$0xf]
    %v2051 = vld [vmem:[#allocation9 + $0xc] sm:$0xf]
    %v2052 = vld [vmem:[#allocation9 + $0x10] sm:$0xf]
    %v2053 = vld [vmem:[#allocation9 + $0x14] sm:$0xf]
    %v2054 = vld [vmem:[#allocation9 + $0x18] sm:$0xf]
    %v2055 = vld [vmem:[#allocation9 + $0x1c] sm:$0xf]
    %v2056 = vld [vmem:[#allocation9 + $0x20] sm:$0xf]
    %v2057 = vld [vmem:[#allocation9 + $0x24] sm:$0xf]
    %v2058 = vld [vmem:[#allocation9 + $0x28] sm:$0xf]
    %v2059 = vld [vmem:[#allocation9 + $0x2c] sm:$0xf]
    %v2060 = vld [vmem:[#allocation9 + $0x30] sm:$0xf]
    %v2061 = vld [vmem:[#allocation9 + $0x34] sm:$0xf]
    %v2062 = vld [vmem:[#allocation9 + $0x38] sm:$0xf]
    %v2063 = vld [vmem:[#allocation9 + $0x3c] sm:$0xf]
    %v2064 = vld [vmem:[%s5] sm:$0x1]
    %v2066 = vlaneseq
    %v2067 = vshrl.u32 %v2066, 7
    %v2068 = vsub.s32 0, %v2067
    %v2069 = vrot.slane %v2064, %v2068
    %v2087 = vunpack.c.l.b16 %v2048
    %v2088 = vunpack.c.l.b16 %v2049
    %v2089 = vunpack.c.l.b16 %v2050
    %v2090 = vunpack.c.l.b16 %v2051
    %v2091 = vunpack.c.l.b16 %v2052
    %v2092 = vunpack.c.l.b16 %v2053
    %v2093 = vunpack.c.l.b16 %v2054
    %v2094 = vunpack.c.l.b16 %v2055
    %v2095 = vunpack.c.l.b16 %v2056
    %v2096 = vunpack.c.l.b16 %v2057
    %v2097 = vunpack.c.l.b16 %v2058
    %v2098 = vunpack.c.l.b16 %v2059
    %v2099 = vunpack.c.l.b16 %v2060
    %v2100 = vunpack.c.l.b16 %v2061
    %v2101 = vunpack.c.l.b16 %v2062
    %v2102 = vunpack.c.l.b16 %v2063
    %v2103 = vpack.c.b16 %v2088, %v2087
    %v2104 = vpack.c.b16 %v2090, %v2089
    %v2105 = vpack.c.b16 %v2092, %v2091
    %v2106 = vpack.c.b16 %v2094, %v2093
    %v2107 = vpack.c.b16 %v2096, %v2095
    %v2108 = vpack.c.b16 %v2098, %v2097
    %v2109 = vpack.c.b16 %v2100, %v2099
    %v2110 = vpack.c.b16 %v2102, %v2101
    %2119 = vmatprep.subr.bf16.mxu0 0
    %2120 = vmatpush1.bf16.msra.mxu0 %v2110
    %2121 = vmatprep.subr.bf16.mxu0 0
    %2122 = vmatpush1.bf16.msra.mxu0 %v2109
    %2123 = vmatprep.subr.bf16.mxu0 0
    %2124 = vmatpush1.bf16.msra.mxu0 %v2108
    %2125 = vmatprep.subr.bf16.mxu0 0
    %2126 = vmatpush1.bf16.msra.mxu0 %v2107
    %2127 = vmatprep.subr.bf16.mxu0 0
    %2128 = vmatpush1.bf16.msra.mxu0 %v2106
    %2129 = vmatprep.subr.bf16.mxu0 0
    %2130 = vmatpush1.bf16.msra.mxu0 %v2105
    %2131 = vmatprep.subr.bf16.mxu0 0
    %2132 = vmatpush1.bf16.msra.mxu0 %v2104
    %2133 = vmatprep.subr.bf16.mxu0 0
    %2134 = vmatpush1.bf16.msra.mxu0 %v2103
    %2135 = vmatprep.subr.bf16.mxu0 0
    %2136 = vmatpush2.bf16.msra.mxu0 0
    %2137 = vmatprep.subr.bf16.mxu0 0
    %2138 = vmatpush2.bf16.msra.mxu0 0
    %2139 = vmatprep.subr.bf16.mxu0 0
    %2140 = vmatpush2.bf16.msra.mxu0 0
    %2141 = vmatprep.subr.bf16.mxu0 0
    %2142 = vmatpush2.bf16.msra.mxu0 0
    %2143 = vmatprep.subr.bf16.mxu0 0
    %2144 = vmatpush2.bf16.msra.mxu0 0
    %2145 = vmatprep.subr.bf16.mxu0 0
    %2146 = vmatpush2.bf16.msra.mxu0 0
    %2147 = vmatprep.subr.bf16.mxu0 0
    %2148 = vmatpush2.bf16.msra.mxu0 0
    %2149 = vmatprep.subr.bf16.mxu0 0
    %2150 = vmatpush2.bf16.msra.mxu0 0
    %2151 = vmatprep.mubr.bf16.mxu0 0
    %2152 = vmatmul.mubr.bf16.gmra.mxu0 %v2047
    %v2153 = vpop.f32.mrf.mxu0
    %v2154 = vadd.f32 %v2069, %v2153
    %v2155 = vpop.f32.mrf.mxu0
    %v2156 = vpop.f32.mrf.mxu0
    %v2157 = vadd.f32 %v2069, %v2156
    %v2158 = vpop.f32.mrf.mxu0
    %2159 = vdwg.mxu0
    %2160 = vst [vmem:[#allocation11] sm:$0xff] %v2154
    %2161 = vst [vmem:[#allocation11 + $0x8] sm:$0xff] %v2157
    // Predicated region
    $region42: #{tpu_custom_call.1} parent=1 // pred_check
      _
    $region43: #{tpu_custom_call.1} parent=1 // pred_check_branch
      %2163 = sbr.rel (0) target = $region45
    $region44: #{tpu_custom_call.1} parent=1 // pred_region
      %s2165 = ssub.s32 256, 256
      %2166 = vsyncadd [#allocation5], %s2165
      %s2167 = sshll.u32 [#allocation11], 4
      %s2168 = int_to_ptr.vmem [resolvable:$true] %s2167
      %2173 = dma.vmem_to_hbm [thread:$0]  %s2168, 256, %s6, [#allocation5], 128, 128, 8
    $region45: #{tpu_custom_call.1} parent=1 // pred_fallthru
      _
    // Predicated region
    $region46: #{tpu_custom_call.1} parent=1 // pred_check
      _
    $region47: #{tpu_custom_call.1} parent=1 // pred_check_branch
      %2175 = sbr.rel (0) target = $region49
    $region48: #{tpu_custom_call.1} parent=1 // pred_region
      %2176 = dma.done [#allocation5], 256
    $region49: #{tpu_custom_call.1} parent=1 // pred_fallthru
      _
    %2177 = vsyncpa [#allocation4], 1
    %2178 = vsyncpa [#allocation7], 1
    %2179 = vsyncpa [#allocation10], 1
    %2180 = vsyncpa [#allocation5], 1

</llo_original>
